<compile_context>
chip_gen: v7x
topology: tpu7x:2x2x1
jax: 0.10.0
libtpu: 0.0.40
codegen_flags: <defaults>
</compile_context>

<pallas_src>
import jax
import jax.numpy as jnp
from jax.experimental import pallas as pl
from jax.experimental.pallas import tpu as pltpu

EMB_DIM = 100          # embedding dim of the reference model
CONV_CH = 100          # out_channels of each Conv1d branch
KSIZES = (3, 4, 5)     # the three kernel sizes
KMAX = 5               # largest kernel size (number of tap matmuls)
EP = 128               # embedding dim padded to a full lane width
CP = 128               # per-branch channel count padded to a full lane width
NBRANCH = 3


def _round_up(x, m):
    return (x + m - 1) // m * m


def _make_kernel(pool_k, pkp):
    """pool_k: MaxPool1d kernel (= L - 8, the single surviving window).
    pkp: pool_k rounded up to a multiple of 8 (sublane-aligned matmul rows)."""

    def kernel(emb_ref, wtap_ref, bconv_ref, wfc_ref, bfc_ref, out_ref):
        # emb_ref  : (tb, Lp, EP)        bf16  lane-padded embedding rows for this batch tile
        # wtap_ref : (KMAX, EP, 3*CP)    bf16  tap-packed conv weights (zeros for unused taps)
        # bconv_ref: (1, 3*CP)           f32
        # wfc_ref  : (3*CP, NCp)         bf16
        # bfc_ref  : (1, NCp)            f32
        # out_ref  : (tb, NCp)           f32
        tb = out_ref.shape[0]
        nc3 = wtap_ref.shape[-1]
        ep = emb_ref.shape[-1]

        # Upcast the tile once; the per-tap position shifts then happen on f32 values
        # (plain sublane relayouts) instead of packed-bf16 offsets.
        embf = emb_ref[...].astype(jnp.float32)                     # (tb, Lp, EP)

        # Three convolutions as KMAX shifted tap matmuls, accumulated in f32 (bias deferred):
        #   conv[b, t, :] = sum_j emb[b, t+j, :] @ wtap[j]   for t in [0, pkp)
        conv = None
        for j in range(KMAX):
            x_j = embf[:, j:j + pkp, :].reshape(tb * pkp, ep).astype(jnp.bfloat16)
            y_j = jnp.dot(x_j, wtap_ref[j], preferred_element_type=jnp.float32)
            conv = y_j if conv is None else conv + y_j
        conv = conv.reshape(tb, pkp, nc3)

        # Mask pool positions that only exist for sublane padding.
        if pkp > pool_k:
            pos = jax.lax.broadcasted_iota(jnp.int32, (tb, pkp, nc3), 1)
            conv = jnp.where(pos < pool_k, conv, jnp.finfo(jnp.float32).min)

        # MaxPool1d(L-8) keeps exactly ONE window; bias-add + ReLU commute past the max
        # (ReLU monotone, bias position-invariant) so they run on the pooled (tb, 384) tile only.
        pooled = jnp.max(conv, axis=1)                               # (tb, 3*CP) f32
        pooled = jnp.maximum(pooled + bconv_ref[...], 0.0)

        # Fused fully-connected layer.
        logits = jnp.dot(pooled.astype(jnp.bfloat16), wfc_ref[...],
                         preferred_element_type=jnp.float32)
        out_ref[...] = logits + bfc_ref[...]

    return kernel


def pack_params(params):
    """One-time parameter conversion (hoisted out of the forward pass)."""
    emb_table, w1, b1, w2, b2, w3, b3, wfc, bfc = params
    vocab, e = emb_table.shape
    c = w1.shape[0]
    num_classes = wfc.shape[0]
    assert e == EMB_DIM and c == CONV_CH

    # Embedding table: pad E -> 128 lanes and cast to bf16 once; gather output is kernel-ready.
    emb_p = jnp.zeros((vocab, EP), jnp.bfloat16).at[:, :e].set(
        emb_table.astype(jnp.bfloat16))

    # Tap-packed conv weights: wtap[j][i, bi*CP + o] = w_bi[o, i, j]  (zeros for j >= k_bi).
    # PyTorch Conv1d: y[o, t] = b[o] + sum_{i,j} w[o, i, j] * emb[t+j, i]
    wtap = jnp.zeros((KMAX, EP, NBRANCH * CP), jnp.float32)
    bconv = jnp.zeros((1, NBRANCH * CP), jnp.float32)
    for bi, (w, b) in enumerate(((w1, b1), (w2, b2), (w3, b3))):
        k = w.shape[-1]
        wk = jnp.transpose(w, (2, 1, 0))                   # (k, E, C): [tap j, in i, out o]
        wtap = wtap.at[:k, :e, bi * CP:bi * CP + c].set(wk)
        bconv = bconv.at[0, bi * CP:bi * CP + c].set(b)
    wtap = wtap.astype(jnp.bfloat16)

    # FC weight/bias re-laid-out to the padded (3*CP, NCp) feature/class layout.
    ncp = _round_up(max(num_classes, 1), 128)
    wfc_p = jnp.zeros((NBRANCH * CP, ncp), jnp.float32)
    for bi in range(NBRANCH):
        wfc_p = wfc_p.at[bi * CP:bi * CP + c, :num_classes].set(
            wfc[:, bi * c:(bi + 1) * c].T)
    wfc_p = wfc_p.astype(jnp.bfloat16)
    bfc_p = jnp.zeros((1, ncp), jnp.float32).at[0, :num_classes].set(bfc)

    return (emb_p, wtap, bconv, wfc_p, bfc_p)


def textcnn_forward(token_ids, packed, *, num_classes):
    """token_ids: (B, L) int32. Returns (B, num_classes) float32 logits."""
    emb_p, wtap, bconv, wfc_p, bfc_p = packed
    B, L = token_ids.shape
    nc3 = wtap.shape[-1]
    ncp = wfc_p.shape[-1]

    pool_k = L - 8                      # MaxPool1d kernel == stride == L - 8
    # Single-pool-window regime (matches the reference for its intended shapes): L >= 15.
    assert L >= 15, "max_seq_len must be >= 15 so MaxPool1d(L-8) yields exactly one window"
    pkp = _round_up(pool_k, 8)          # sublane-aligned pool rows (padded ones masked in-kernel)
    lp = _round_up(L, 8)                # lp = pkp + 8 >= pkp + KMAX - 1: every tap slice in bounds
    assert lp >= pkp + KMAX - 1

    # ---- batch tiling -----------------------------------------------------------
    # ~2048 matmul rows per grid step => ~3 MiB f32 conv temp + ~1-2 MiB bf16 emb tile
    # (fits scoped-VMEM defaults on v5e/v6e/v7x); >=2 grid steps kept for v7x megacore.
    rows_target = 2048
    tb_raw = max(8, (rows_target // pkp) // 8 * 8)
    if B <= tb_raw:
        tb = _round_up(pl.cdiv(B, 2), 8) if B >= 16 else B
    else:
        tb = tb_raw
    bp = _round_up(B, tb)
    # TODO(synk): for very long sequences (pkp*8 > rows_target) switch to a running-max loop over
    # pool-position groups so the f32 conv temp stays bounded on v7x's smaller VMEM.

    # ---- embedding gather (data-dependent; stays in XLA glue) --------------------
    # Pad the tiny token-id matrix instead of the gathered activations; the gather then writes the
    # kernel-ready (bp, lp, 128) bf16 tensor in a single pass.
    # TODO(synk): fuse the gather in-kernel (scalar-prefetched ids + VMEM-resident table).
    ids = token_ids.astype(jnp.int32)
    if bp > B or lp > L:
        ids = jnp.pad(ids, ((0, bp - B), (0, lp - L)))
    emb = jnp.take(emb_p, ids, axis=0)                     # (bp, lp, EP) bf16

    out = pl.pallas_call(
        _make_kernel(pool_k, pkp),
        out_shape=jax.ShapeDtypeStruct((bp, ncp), jnp.float32),
        grid=(bp // tb,),
        in_specs=[
            pl.BlockSpec((tb, lp, EP), lambda i: (i, 0, 0)),       # embedding batch tile
            pl.BlockSpec((KMAX, EP, nc3), lambda i: (0, 0, 0)),    # tap-packed conv weights
            pl.BlockSpec((1, nc3), lambda i: (0, 0)),              # packed conv bias
            pl.BlockSpec((nc3, ncp), lambda i: (0, 0)),            # packed fc weight
            pl.BlockSpec((1, ncp), lambda i: (0, 0)),              # packed fc bias
        ],
        out_specs=pl.BlockSpec((tb, ncp), lambda i: (i, 0)),
        compiler_params=pltpu.CompilerParams(
            dimension_semantics=("parallel",)),
    )(emb, wtap, bconv, wfc_p, bfc_p)

    return out[:B, :num_classes]


def reference_forward(token_ids, params):
    """Pure-JAX f32 reference matching the PyTorch module (tolerance check only)."""
    emb_table, w1, b1, w2, b2, w3, b3, wfc, bfc = params
    B, L = token_ids.shape
    pool_k = L - 8
    emb = jnp.take(emb_table, token_ids, axis=0)           # (B, L, E) f32

    def branch(w, b):
        k = w.shape[-1]
        out_len = L - k + 1
        y = jnp.zeros((B, out_len, w.shape[0]), jnp.float32)
        for j in range(k):
            y = y + jnp.einsum('bti,oi->bto', emb[:, j:j + out_len, :], w[:, :, j])
        y = jax.nn.relu(y + b)
        return jnp.max(y[:, :pool_k, :], axis=1)           # MaxPool1d(L-8): one window

    feats = jnp.concatenate([branch(w1, b1), branch(w2, b2), branch(w3, b3)], axis=-1)
    return feats @ wfc.T + bfc


def init_params(key, vocab_size, num_classes):
    ks = jax.random.split(key, 9)
    emb_table = jax.random.normal(ks[0], (vocab_size, EMB_DIM), jnp.float32)
    w1 = 0.05 * jax.random.normal(ks[1], (CONV_CH, EMB_DIM, 3), jnp.float32)
    b1 = 0.05 * jax.random.normal(ks[2], (CONV_CH,), jnp.float32)
    w2 = 0.05 * jax.random.normal(ks[3], (CONV_CH, EMB_DIM, 4), jnp.float32)
    b2 = 0.05 * jax.random.normal(ks[4], (CONV_CH,), jnp.float32)
    w3 = 0.05 * jax.random.normal(ks[5], (CONV_CH, EMB_DIM, 5), jnp.float32)
    b3 = 0.05 * jax.random.normal(ks[6], (CONV_CH,), jnp.float32)
    wfc = 0.05 * jax.random.normal(ks[7], (num_classes, 3 * CONV_CH), jnp.float32)
    bfc = 0.05 * jax.random.normal(ks[8], (num_classes,), jnp.float32)
    return (emb_table, w1, b1, w2, b2, w3, b3, wfc, bfc)


if __name__ == "__main__":
    key = jax.random.PRNGKey(0)
    k_params, k_tokens = jax.random.split(key)

    vocab_size = 50
    num_classes = 4
    batch = 2
    max_seq_len = 16      # pool kernel = 16 - 8 = 8 -> exactly one pool window per branch

    params = init_params(k_params, vocab_size, num_classes)
    packed = pack_params(params)        # one-time weight packing (hoisted out of forward)
    token_ids = jax.random.randint(k_tokens, (batch, max_seq_len), 0, vocab_size,
                                   dtype=jnp.int32)

    fwd = jax.jit(textcnn_forward, static_argnames=("num_classes",))
    logits = fwd(token_ids, packed, num_classes=num_classes)
    logits = jax.block_until_ready(logits)

    assert logits.shape == (batch, num_classes)
    assert bool(jnp.all(jnp.isfinite(logits)))

    # bf16-operand kernel vs f32 reference: expect ~1e-2 level differences in the logits
    ref = reference_forward(token_ids, params)
    max_err = float(jnp.max(jnp.abs(logits - ref)))
    assert max_err < 0.1, f"kernel vs reference mismatch: max abs err {max_err}"

    print("KERNEL_OK")
</pallas_src>

<mosaic_0001>
module attributes {stable_mosaic.version = 11 : i64} {
  func.func @kernel(%arg0: i32, %arg1: memref<2x16x128xbf16, #tpu.memory_space<vmem>>, %arg2: memref<5x128x384xbf16, #tpu.memory_space<vmem>>, %arg3: memref<1x384xf32, #tpu.memory_space<vmem>>, %arg4: memref<384x128xbf16, #tpu.memory_space<vmem>>, %arg5: memref<1x128xf32, #tpu.memory_space<vmem>>, %arg6: memref<2x128xf32, #tpu.memory_space<vmem>>) attributes {dimension_semantics = [#tpu.dimension_semantics<parallel>], iteration_bounds = array<i64: 1>, scalar_prefetch = 0 : i64, scratch_operands = 0 : i64, tpu.core_type = #tpu.core_type<tc>, window_params = [{transform_indices = @transform_0, window_bounds = array<i64: 2, 16, 128>}, {pipeline_mode = #tpu.pipeline_mode<synchronous>, transform_indices = @transform_1, window_bounds = array<i64: 5, 128, 384>}, {pipeline_mode = #tpu.pipeline_mode<synchronous>, transform_indices = @transform_2, window_bounds = array<i64: 1, 384>}, {pipeline_mode = #tpu.pipeline_mode<synchronous>, transform_indices = @transform_3, window_bounds = array<i64: 384, 128>}, {pipeline_mode = #tpu.pipeline_mode<synchronous>, transform_indices = @transform_4, window_bounds = array<i64: 1, 128>}, {transform_indices = @transform_5, window_bounds = array<i64: 2, 128>}]} {
    %c0 = arith.constant 0 : index
    %c0_0 = arith.constant 0 : index
    %c0_1 = arith.constant 0 : index
    %0 = vector.load %arg1[%c0, %c0_0, %c0_1] : memref<2x16x128xbf16, #tpu.memory_space<vmem>>, vector<2x16x128xbf16>
    %1 = arith.extf %0 : vector<2x16x128xbf16> to vector<2x16x128xf32>
    %2 = vector.extract_strided_slice %1 {offsets = [0, 0, 0], sizes = [2, 8, 128], strides = [1, 1, 1]} : vector<2x16x128xf32> to vector<2x8x128xf32>
    %3 = vector.shape_cast %2 : vector<2x8x128xf32> to vector<16x128xf32>
    %4 = arith.truncf %3 : vector<16x128xf32> to vector<16x128xbf16>
    %c0_2 = arith.constant 0 : index
    %c0_3 = arith.constant 0 : index
    %c0_4 = arith.constant 0 : index
    %5 = vector.load %arg2[%c0_2, %c0_3, %c0_4] : memref<5x128x384xbf16, #tpu.memory_space<vmem>>, vector<1x128x384xbf16>
    %6 = vector.shape_cast %5 : vector<1x128x384xbf16> to vector<128x384xbf16>
    %cst = arith.constant dense<0.000000e+00> : vector<16x384xf32>
    %7 = tpu.matmul %4, %6, %cst {dimension_numbers = #tpu.dot_dimension_numbers<[1], [0], [0], [1], [0, 0, 1, 1], [], []>} : vector<16x128xbf16>, vector<128x384xbf16>, vector<16x384xf32> -> vector<16x384xf32>
    %8 = vector.extract_strided_slice %1 {offsets = [0, 1, 0], sizes = [2, 8, 128], strides = [1, 1, 1]} : vector<2x16x128xf32> to vector<2x8x128xf32>
    %9 = vector.shape_cast %8 : vector<2x8x128xf32> to vector<16x128xf32>
    %10 = arith.truncf %9 : vector<16x128xf32> to vector<16x128xbf16>
    %c1 = arith.constant 1 : index
    %c0_5 = arith.constant 0 : index
    %c0_6 = arith.constant 0 : index
    %11 = vector.load %arg2[%c1, %c0_5, %c0_6] : memref<5x128x384xbf16, #tpu.memory_space<vmem>>, vector<1x128x384xbf16>
    %12 = vector.shape_cast %11 : vector<1x128x384xbf16> to vector<128x384xbf16>
    %cst_7 = arith.constant dense<0.000000e+00> : vector<16x384xf32>
    %13 = tpu.matmul %10, %12, %cst_7 {dimension_numbers = #tpu.dot_dimension_numbers<[1], [0], [0], [1], [0, 0, 1, 1], [], []>} : vector<16x128xbf16>, vector<128x384xbf16>, vector<16x384xf32> -> vector<16x384xf32>
    %14 = arith.addf %7, %13 : vector<16x384xf32>
    %15 = vector.extract_strided_slice %1 {offsets = [0, 2, 0], sizes = [2, 8, 128], strides = [1, 1, 1]} : vector<2x16x128xf32> to vector<2x8x128xf32>
    %16 = vector.shape_cast %15 : vector<2x8x128xf32> to vector<16x128xf32>
    %17 = arith.truncf %16 : vector<16x128xf32> to vector<16x128xbf16>
    %c2 = arith.constant 2 : index
    %c0_8 = arith.constant 0 : index
    %c0_9 = arith.constant 0 : index
    %18 = vector.load %arg2[%c2, %c0_8, %c0_9] : memref<5x128x384xbf16, #tpu.memory_space<vmem>>, vector<1x128x384xbf16>
    %19 = vector.shape_cast %18 : vector<1x128x384xbf16> to vector<128x384xbf16>
    %cst_10 = arith.constant dense<0.000000e+00> : vector<16x384xf32>
    %20 = tpu.matmul %17, %19, %cst_10 {dimension_numbers = #tpu.dot_dimension_numbers<[1], [0], [0], [1], [0, 0, 1, 1], [], []>} : vector<16x128xbf16>, vector<128x384xbf16>, vector<16x384xf32> -> vector<16x384xf32>
    %21 = arith.addf %14, %20 : vector<16x384xf32>
    %22 = vector.extract_strided_slice %1 {offsets = [0, 3, 0], sizes = [2, 8, 128], strides = [1, 1, 1]} : vector<2x16x128xf32> to vector<2x8x128xf32>
    %23 = vector.shape_cast %22 : vector<2x8x128xf32> to vector<16x128xf32>
    %24 = arith.truncf %23 : vector<16x128xf32> to vector<16x128xbf16>
    %c3 = arith.constant 3 : index
    %c0_11 = arith.constant 0 : index
    %c0_12 = arith.constant 0 : index
    %25 = vector.load %arg2[%c3, %c0_11, %c0_12] : memref<5x128x384xbf16, #tpu.memory_space<vmem>>, vector<1x128x384xbf16>
    %26 = vector.shape_cast %25 : vector<1x128x384xbf16> to vector<128x384xbf16>
    %cst_13 = arith.constant dense<0.000000e+00> : vector<16x384xf32>
    %27 = tpu.matmul %24, %26, %cst_13 {dimension_numbers = #tpu.dot_dimension_numbers<[1], [0], [0], [1], [0, 0, 1, 1], [], []>} : vector<16x128xbf16>, vector<128x384xbf16>, vector<16x384xf32> -> vector<16x384xf32>
    %28 = arith.addf %21, %27 : vector<16x384xf32>
    %29 = vector.extract_strided_slice %1 {offsets = [0, 4, 0], sizes = [2, 8, 128], strides = [1, 1, 1]} : vector<2x16x128xf32> to vector<2x8x128xf32>
    %30 = vector.shape_cast %29 : vector<2x8x128xf32> to vector<16x128xf32>
    %31 = arith.truncf %30 : vector<16x128xf32> to vector<16x128xbf16>
    %c4 = arith.constant 4 : index
    %c0_14 = arith.constant 0 : index
    %c0_15 = arith.constant 0 : index
    %32 = vector.load %arg2[%c4, %c0_14, %c0_15] : memref<5x128x384xbf16, #tpu.memory_space<vmem>>, vector<1x128x384xbf16>
    %33 = vector.shape_cast %32 : vector<1x128x384xbf16> to vector<128x384xbf16>
    %cst_16 = arith.constant dense<0.000000e+00> : vector<16x384xf32>
    %34 = tpu.matmul %31, %33, %cst_16 {dimension_numbers = #tpu.dot_dimension_numbers<[1], [0], [0], [1], [0, 0, 1, 1], [], []>} : vector<16x128xbf16>, vector<128x384xbf16>, vector<16x384xf32> -> vector<16x384xf32>
    %35 = arith.addf %28, %34 : vector<16x384xf32>
    %36 = vector.shape_cast %35 : vector<16x384xf32> to vector<2x8x384xf32>
    %cst_17 = arith.constant dense<0xFF800000> : vector<2x384xf32>
    %37 = vector.multi_reduction <maximumf>, %36, %cst_17 [1] : vector<2x8x384xf32> to vector<2x384xf32>
    %c0_18 = arith.constant 0 : index
    %c0_19 = arith.constant 0 : index
    %38 = vector.load %arg3[%c0_18, %c0_19] : memref<1x384xf32, #tpu.memory_space<vmem>>, vector<1x384xf32>
    %39 = vector.broadcast %38 : vector<1x384xf32> to vector<2x384xf32>
    %40 = arith.addf %37, %39 : vector<2x384xf32>
    %cst_20 = arith.constant 0.000000e+00 : f32
    %41 = vector.broadcast %cst_20 : f32 to vector<2x384xf32>
    %42 = arith.maximumf %40, %41 : vector<2x384xf32>
    %43 = arith.truncf %42 : vector<2x384xf32> to vector<2x384xbf16>
    %c0_21 = arith.constant 0 : index
    %c0_22 = arith.constant 0 : index
    %44 = vector.load %arg4[%c0_21, %c0_22] : memref<384x128xbf16, #tpu.memory_space<vmem>>, vector<384x128xbf16>
    %cst_23 = arith.constant dense<0.000000e+00> : vector<2x128xf32>
    %45 = tpu.matmul %43, %44, %cst_23 {dimension_numbers = #tpu.dot_dimension_numbers<[1], [0], [0], [1], [0, 0, 1, 1], [], []>} : vector<2x384xbf16>, vector<384x128xbf16>, vector<2x128xf32> -> vector<2x128xf32>
    %c0_24 = arith.constant 0 : index
    %c0_25 = arith.constant 0 : index
    %46 = vector.load %arg5[%c0_24, %c0_25] : memref<1x128xf32, #tpu.memory_space<vmem>>, vector<1x128xf32>
    %47 = vector.broadcast %46 : vector<1x128xf32> to vector<2x128xf32>
    %48 = arith.addf %45, %47 : vector<2x128xf32>
    %c0_26 = arith.constant 0 : index
    %c0_27 = arith.constant 0 : index
    %49 = vector.load %arg6[%c0_26, %c0_27] : memref<2x128xf32, #tpu.memory_space<vmem>>, vector<2x128xf32>
    tpu.vector_store %arg6[%c0_26, %c0_27], %48 {strides = array<i32>} : memref<2x128xf32, #tpu.memory_space<vmem>>, vector<2x128xf32>,
    return
  }
  func.func @transform_0(%arg0: i32) -> (i32, i32, i32) {
    %c0_i32 = arith.constant 0 : i32
    %c0_i32_0 = arith.constant 0 : i32
    %c0_i32_1 = arith.constant 0 : i32
    return %arg0, %c0_i32, %c0_i32_0 : i32, i32, i32
  }
  func.func @transform_1(%arg0: i32) -> (i32, i32, i32) {
    %c0_i32 = arith.constant 0 : i32
    %c0_i32_0 = arith.constant 0 : i32
    %c0_i32_1 = arith.constant 0 : i32
    %c0_i32_2 = arith.constant 0 : i32
    return %c0_i32, %c0_i32_0, %c0_i32_1 : i32, i32, i32
  }
  func.func @transform_2(%arg0: i32) -> (i32, i32) {
    %c0_i32 = arith.constant 0 : i32
    %c0_i32_0 = arith.constant 0 : i32
    %c0_i32_1 = arith.constant 0 : i32
    return %c0_i32, %c0_i32_0 : i32, i32
  }
  func.func @transform_3(%arg0: i32) -> (i32, i32) {
    %c0_i32 = arith.constant 0 : i32
    %c0_i32_0 = arith.constant 0 : i32
    %c0_i32_1 = arith.constant 0 : i32
    return %c0_i32, %c0_i32_0 : i32, i32
  }
  func.func @transform_4(%arg0: i32) -> (i32, i32) {
    %c0_i32 = arith.constant 0 : i32
    %c0_i32_0 = arith.constant 0 : i32
    %c0_i32_1 = arith.constant 0 : i32
    return %c0_i32, %c0_i32_0 : i32, i32
  }
  func.func @transform_5(%arg0: i32) -> (i32, i32) {
    %c0_i32 = arith.constant 0 : i32
    %c0_i32_0 = arith.constant 0 : i32
    return %arg0, %c0_i32 : i32, i32
  }
}

</mosaic_0001>

<llo_original>
// kernel: textcnn_forward.1
$region0: #{textcnn_forward.1}
  #allocation0 [shape = 'u32[]', space=smem, size = 0x4, offset = 0x4, fixed_abs, tag = 'smem constant byte address 0x4 - core index']
  #allocation1 [shape = 'u32[144,128]{1,0:T(1,128)}', space=vmem, size = 0x12000, scoped, tag = 'internal scratch']
  %s0 = inlined_call_operand.vmem [shape: bf16[2,16,128], index: 0, kind: input, shape index: {}]
  %s1 = inlined_call_operand.hbm [shape: bf16[5,128,384], index: 1, kind: input, shape index: {}]
  %s2 = inlined_call_operand.vmem [shape: f32[1,384], index: 2, kind: input, shape index: {}]
  %s3 = inlined_call_operand.vmem [shape: bf16[384,128], index: 3, kind: input, shape index: {}]
  %s4 = inlined_call_operand.vmem [shape: f32[1,128], index: 4, kind: input, shape index: {}]
  %s5 = inlined_call_operand.hbm [shape: f32[2,128], index: 5, kind: output, shape index: {}]
  %s6 = sld [smem:[#allocation0]]
  $region34: #{textcnn_forward.1} parent=0
    _
  %s8 = ssub.s32 1, %s6
  %s9 = scalar_select 0, %s8, %s6
  $region1: #{textcnn_forward.1} parent=0
    #allocation2 [shape = 'u8[491520]{0}', space=vmem, size = 0x78000, scoped, tag = 'input window, operand 1, single buffered']
    #allocation3 [shape = 's32[1]{0}', space=sflag, size = 0x4, scoped, tag = 'scoped memory for textcnn_forward.1']
    #allocation4 [shape = 's32[1]{0}', space=sflag, size = 0x4, scoped, tag = 'scoped memory for textcnn_forward.1']
    #allocation5 [shape = 'u8[1024]{0}', space=vmem, size = 0x400, scoped, tag = 'output window, operand 0, single buffered']
    %10 = vsyncpa [#allocation3], 0
    %11 = vsyncpa [#allocation4], 0
    // Predicated region
    $region2: #{textcnn_forward.1} parent=1 // pred_check
      _
    $region3: #{textcnn_forward.1} parent=1 // pred_check_branch
      %13 = sbr.rel (0) target = $region5
    $region4: #{textcnn_forward.1} parent=1 // pred_region
      _
    $region5: #{textcnn_forward.1} parent=1 // pred_fallthru
      _
    // Predicated region
    $region6: #{textcnn_forward.1} parent=1 // pred_check
      _
    $region7: #{textcnn_forward.1} parent=1 // pred_check_branch
      %15 = sbr.rel (0) target = $region9
    $region8: #{textcnn_forward.1} parent=1 // pred_region
      %s17 = ssub.s32 15360, 15360
      %18 = vsyncadd [#allocation3], %s17
      %s19 = sshll.u32 [#allocation2], 4
      %s20 = int_to_ptr.vmem [resolvable:$true] %s19
      %25 = dma.hbm_to_vmem [thread:$0]  %s1, 15360, %s20, [#allocation3], 192, 192, 12
    $region9: #{textcnn_forward.1} parent=1 // pred_fallthru
      _
    // Predicated region
    $region10: #{textcnn_forward.1} parent=1 // pred_check
      _
    $region11: #{textcnn_forward.1} parent=1 // pred_check_branch
      %27 = sbr.rel (0) target = $region13
    $region12: #{textcnn_forward.1} parent=1 // pred_region
      _
    $region13: #{textcnn_forward.1} parent=1 // pred_fallthru
      _
    // Predicated region
    $region14: #{textcnn_forward.1} parent=1 // pred_check
      _
    $region15: #{textcnn_forward.1} parent=1 // pred_check_branch
      %29 = sbr.rel (0) target = $region17
    $region16: #{textcnn_forward.1} parent=1 // pred_region
      _
    $region17: #{textcnn_forward.1} parent=1 // pred_fallthru
      _
    // Predicated region
    $region18: #{textcnn_forward.1} parent=1 // pred_check
      _
    $region19: #{textcnn_forward.1} parent=1 // pred_check_branch
      %31 = sbr.rel (0) target = $region21
    $region20: #{textcnn_forward.1} parent=1 // pred_region
      _
    $region21: #{textcnn_forward.1} parent=1 // pred_fallthru
      _
    // Predicated region
    $region22: #{textcnn_forward.1} parent=1 // pred_check
      _
    $region23: #{textcnn_forward.1} parent=1 // pred_check_branch
      %33 = sbr.rel (0) target = $region25
    $region24: #{textcnn_forward.1} parent=1 // pred_region
      %34 = dma.done [#allocation3], 15360
    $region25: #{textcnn_forward.1} parent=1 // pred_fallthru
      _
    %v36 = vld [vmem:[%s0] sm:$0xf]
    %v37 = vld [vmem:[%s0 + $0x4] sm:$0xf]
    %v38 = vld [vmem:[%s0 + $0x8] sm:$0xf]
    %v39 = vld [vmem:[%s0 + $0xc] sm:$0xf]
    %v40 = vunpack.c.l.bf16 %v36
    %v41 = vunpack.c.l.bf16 %v37
    %v42 = vunpack.c.l.bf16 %v38
    %v43 = vunpack.c.l.bf16 %v39
    %v44 = vpack.c.bf16 %v42, %v40
    %v45 = vld [vmem:[#allocation2] sm:$0xff]
    %v46 = vld [vmem:[#allocation2 + $0x8] sm:$0xf]
    %v47 = vld [vmem:[#allocation2 + $0xc] sm:$0xff]
    %v48 = vld [vmem:[#allocation2 + $0x14] sm:$0xf]
    %v49 = vld [vmem:[#allocation2 + $0x18] sm:$0xff]
    %v50 = vld [vmem:[#allocation2 + $0x20] sm:$0xf]
    %v51 = vld [vmem:[#allocation2 + $0x24] sm:$0xff]
    %v52 = vld [vmem:[#allocation2 + $0x2c] sm:$0xf]
    %v53 = vld [vmem:[#allocation2 + $0x30] sm:$0xff]
    %v54 = vld [vmem:[#allocation2 + $0x38] sm:$0xf]
    %v55 = vld [vmem:[#allocation2 + $0x3c] sm:$0xff]
    %v56 = vld [vmem:[#allocation2 + $0x44] sm:$0xf]
    %v57 = vld [vmem:[#allocation2 + $0x48] sm:$0xff]
    %v58 = vld [vmem:[#allocation2 + $0x50] sm:$0xf]
    %v59 = vld [vmem:[#allocation2 + $0x54] sm:$0xff]
    %v60 = vld [vmem:[#allocation2 + $0x5c] sm:$0xf]
    %v61 = vld [vmem:[#allocation2 + $0x60] sm:$0xff]
    %v62 = vld [vmem:[#allocation2 + $0x68] sm:$0xf]
    %v63 = vld [vmem:[#allocation2 + $0x6c] sm:$0xff]
    %v64 = vld [vmem:[#allocation2 + $0x74] sm:$0xf]
    %v65 = vld [vmem:[#allocation2 + $0x78] sm:$0xff]
    %v66 = vld [vmem:[#allocation2 + $0x80] sm:$0xf]
    %v67 = vld [vmem:[#allocation2 + $0x84] sm:$0xff]
    %v68 = vld [vmem:[#allocation2 + $0x8c] sm:$0xf]
    %v69 = vld [vmem:[#allocation2 + $0x90] sm:$0xff]
    %v70 = vld [vmem:[#allocation2 + $0x98] sm:$0xf]
    %v71 = vld [vmem:[#allocation2 + $0x9c] sm:$0xff]
    %v72 = vld [vmem:[#allocation2 + $0xa4] sm:$0xf]
    %v73 = vld [vmem:[#allocation2 + $0xa8] sm:$0xff]
    %v74 = vld [vmem:[#allocation2 + $0xb0] sm:$0xf]
    %v75 = vld [vmem:[#allocation2 + $0xb4] sm:$0xff]
    %v76 = vld [vmem:[#allocation2 + $0xbc] sm:$0xf]
    %vm81 = vcmask 1046528
    %v82 = vrot.slane %v40, 1
    %v83 = vrot.slane %v41, 1
    %v84 = vsel %vm81, %v82, %v83
    %v85 = vrot.slane %v42, 1
    %v86 = vrot.slane %v43, 1
    %v87 = vsel %vm81, %v85, %v86
    %v90 = vpack.c.bf16 %v87, %v84
    %s91 = scalar_lea.vmem [#allocation2], 192
    %v92 = vld [vmem:[%s91] sm:$0xff]
    %v93 = vld [vmem:[%s91 + $0x8] sm:$0xf]
    %v94 = vld [vmem:[%s91 + $0xc] sm:$0xff]
    %v95 = vld [vmem:[%s91 + $0x14] sm:$0xf]
    %v96 = vld [vmem:[%s91 + $0x18] sm:$0xff]
    %v97 = vld [vmem:[%s91 + $0x20] sm:$0xf]
    %v98 = vld [vmem:[%s91 + $0x24] sm:$0xff]
    %v99 = vld [vmem:[%s91 + $0x2c] sm:$0xf]
    %v100 = vld [vmem:[%s91 + $0x30] sm:$0xff]
    %v101 = vld [vmem:[%s91 + $0x38] sm:$0xf]
    %v102 = vld [vmem:[%s91 + $0x3c] sm:$0xff]
    %v103 = vld [vmem:[%s91 + $0x44] sm:$0xf]
    %v104 = vld [vmem:[%s91 + $0x48] sm:$0xff]
    %v105 = vld [vmem:[%s91 + $0x50] sm:$0xf]
    %v106 = vld [vmem:[%s91 + $0x54] sm:$0xff]
    %v107 = vld [vmem:[%s91 + $0x5c] sm:$0xf]
    %v108 = vld [vmem:[%s91 + $0x60] sm:$0xff]
    %v109 = vld [vmem:[%s91 + $0x68] sm:$0xf]
    %v110 = vld [vmem:[%s91 + $0x6c] sm:$0xff]
    %v111 = vld [vmem:[%s91 + $0x74] sm:$0xf]
    %v112 = vld [vmem:[%s91 + $0x78] sm:$0xff]
    %v113 = vld [vmem:[%s91 + $0x80] sm:$0xf]
    %v114 = vld [vmem:[%s91 + $0x84] sm:$0xff]
    %v115 = vld [vmem:[%s91 + $0x8c] sm:$0xf]
    %v116 = vld [vmem:[%s91 + $0x90] sm:$0xff]
    %v117 = vld [vmem:[%s91 + $0x98] sm:$0xf]
    %v118 = vld [vmem:[%s91 + $0x9c] sm:$0xff]
    %v119 = vld [vmem:[%s91 + $0xa4] sm:$0xf]
    %v120 = vld [vmem:[%s91 + $0xa8] sm:$0xff]
    %v121 = vld [vmem:[%s91 + $0xb0] sm:$0xf]
    %v122 = vld [vmem:[%s91 + $0xb4] sm:$0xff]
    %v123 = vld [vmem:[%s91 + $0xbc] sm:$0xf]
    %v156 = vunpack.c.l.b16 %v92
    %v157 = vunpack.c.h.b16 %v92
    %v158 = vunpack.c.l.b16 %v93
    %v159 = vunpack.c.l.b16 %v94
    %v160 = vunpack.c.h.b16 %v94
    %v161 = vunpack.c.l.b16 %v95
    %v162 = vunpack.c.l.b16 %v96
    %v163 = vunpack.c.h.b16 %v96
    %v164 = vunpack.c.l.b16 %v97
    %v165 = vunpack.c.l.b16 %v98
    %v166 = vunpack.c.h.b16 %v98
    %v167 = vunpack.c.l.b16 %v99
    %v168 = vunpack.c.l.b16 %v100
    %v169 = vunpack.c.h.b16 %v100
    %v170 = vunpack.c.l.b16 %v101
    %v171 = vunpack.c.l.b16 %v102
    %v172 = vunpack.c.h.b16 %v102
    %v173 = vunpack.c.l.b16 %v103
    %v174 = vunpack.c.l.b16 %v104
    %v175 = vunpack.c.h.b16 %v104
    %v176 = vunpack.c.l.b16 %v105
    %v177 = vunpack.c.l.b16 %v106
    %v178 = vunpack.c.h.b16 %v106
    %v179 = vunpack.c.l.b16 %v107
    %v180 = vunpack.c.l.b16 %v108
    %v181 = vunpack.c.h.b16 %v108
    %v182 = vunpack.c.l.b16 %v109
    %v183 = vunpack.c.l.b16 %v110
    %v184 = vunpack.c.h.b16 %v110
    %v185 = vunpack.c.l.b16 %v111
    %v186 = vunpack.c.l.b16 %v112
    %v187 = vunpack.c.h.b16 %v112
    %v188 = vunpack.c.l.b16 %v113
    %v189 = vunpack.c.l.b16 %v114
    %v190 = vunpack.c.h.b16 %v114
    %v191 = vunpack.c.l.b16 %v115
    %v192 = vunpack.c.l.b16 %v116
    %v193 = vunpack.c.h.b16 %v116
    %v194 = vunpack.c.l.b16 %v117
    %v195 = vunpack.c.l.b16 %v118
    %v196 = vunpack.c.h.b16 %v118
    %v197 = vunpack.c.l.b16 %v119
    %v198 = vunpack.c.l.b16 %v120
    %v199 = vunpack.c.h.b16 %v120
    %v200 = vunpack.c.l.b16 %v121
    %v201 = vunpack.c.l.b16 %v122
    %v202 = vunpack.c.h.b16 %v122
    %v203 = vunpack.c.l.b16 %v123
    %v204 = vpack.c.b16 %v159, %v156
    %v205 = vpack.c.b16 %v160, %v157
    %v206 = vpack.c.b16 %v161, %v158
    %v207 = vpack.c.b16 %v165, %v162
    %v208 = vpack.c.b16 %v166, %v163
    %v209 = vpack.c.b16 %v167, %v164
    %v210 = vpack.c.b16 %v171, %v168
    %v211 = vpack.c.b16 %v172, %v169
    %v212 = vpack.c.b16 %v173, %v170
    %v213 = vpack.c.b16 %v177, %v174
    %v214 = vpack.c.b16 %v178, %v175
    %v215 = vpack.c.b16 %v179, %v176
    %v216 = vpack.c.b16 %v183, %v180
    %v217 = vpack.c.b16 %v184, %v181
    %v218 = vpack.c.b16 %v185, %v182
    %v219 = vpack.c.b16 %v189, %v186
    %v220 = vpack.c.b16 %v190, %v187
    %v221 = vpack.c.b16 %v191, %v188
    %v222 = vpack.c.b16 %v195, %v192
    %v223 = vpack.c.b16 %v196, %v193
    %v224 = vpack.c.b16 %v197, %v194
    %v225 = vpack.c.b16 %v201, %v198
    %v226 = vpack.c.b16 %v202, %v199
    %v227 = vpack.c.b16 %v203, %v200
    %252 = vmatprep.subr.bf16.mxu0 %v205
    %253 = vmatpush1.bf16.msra.mxu0 %v204
    %254 = vmatprep.subr.bf16.mxu0 %v208
    %255 = vmatpush1.bf16.msra.mxu0 %v207
    %256 = vmatprep.subr.bf16.mxu0 %v211
    %257 = vmatpush1.bf16.msra.mxu0 %v210
    %258 = vmatprep.subr.bf16.mxu0 %v214
    %259 = vmatpush1.bf16.msra.mxu0 %v213
    %260 = vmatprep.subr.bf16.mxu0 %v217
    %261 = vmatpush1.bf16.msra.mxu0 %v216
    %262 = vmatprep.subr.bf16.mxu0 %v220
    %263 = vmatpush1.bf16.msra.mxu0 %v219
    %264 = vmatprep.subr.bf16.mxu0 %v223
    %265 = vmatpush1.bf16.msra.mxu0 %v222
    %266 = vmatprep.subr.bf16.mxu0 %v226
    %267 = vmatpush1.bf16.msra.mxu0 %v225
    %268 = vmatprep.subr.bf16.mxu0 0
    %269 = vmatpush1.bf16.msra.mxu0 0
    %270 = vmatprep.subr.bf16.mxu0 0
    %271 = vmatpush1.bf16.msra.mxu0 0
    %272 = vmatprep.subr.bf16.mxu0 0
    %273 = vmatpush1.bf16.msra.mxu0 0
    %274 = vmatprep.subr.bf16.mxu0 0
    %275 = vmatpush1.bf16.msra.mxu0 0
    %276 = vmatprep.subr.bf16.mxu0 0
    %277 = vmatpush1.bf16.msra.mxu0 0
    %278 = vmatprep.subr.bf16.mxu0 0
    %279 = vmatpush1.bf16.msra.mxu0 0
    %280 = vmatprep.subr.bf16.mxu0 0
    %281 = vmatpush1.bf16.msra.mxu0 0
    %282 = vmatprep.subr.bf16.mxu0 0
    %283 = vmatpush1.bf16.msra.mxu0 0
    %284 = vmatprep.mubr.bf16.mxu0 0
    %285 = vmatmul.mubr.bf16.gmra.mrb[0].mxu0 %v90
    %v286 = vpop.f32.mrb[0].mxu0
    %v287 = vadd.f32 0.0, %v286
    %v288 = vpop.f32.mrb[0].mxu0
    %v289 = vadd.f32 0.0, %v288
    %v290 = vpop.f32.mrb[0].mxu0
    %v291 = vadd.f32 0.0, %v290
    %v292 = vpop.f32.mrb[0].mxu0
    %v293 = vadd.f32 0.0, %v292
    %294 = vdwg.mxu0
    %295 = vmatprep.subr.bf16.mxu0 0
    %296 = vmatpush1.bf16.msra.mxu0 %v206
    %297 = vmatprep.subr.bf16.mxu0 0
    %298 = vmatpush1.bf16.msra.mxu0 %v209
    %299 = vmatprep.subr.bf16.mxu0 0
    %300 = vmatpush1.bf16.msra.mxu0 %v212
    %301 = vmatprep.subr.bf16.mxu0 0
    %302 = vmatpush1.bf16.msra.mxu0 %v215
    %303 = vmatprep.subr.bf16.mxu0 0
    %304 = vmatpush1.bf16.msra.mxu0 %v218
    %305 = vmatprep.subr.bf16.mxu0 0
    %306 = vmatpush1.bf16.msra.mxu0 %v221
    %307 = vmatprep.subr.bf16.mxu0 0
    %308 = vmatpush1.bf16.msra.mxu0 %v224
    %309 = vmatprep.subr.bf16.mxu0 0
    %310 = vmatpush1.bf16.msra.mxu0 %v227
    %311 = vmatprep.subr.bf16.mxu0 0
    %312 = vmatpush1.bf16.msra.mxu0 0
    %313 = vmatprep.subr.bf16.mxu0 0
    %314 = vmatpush1.bf16.msra.mxu0 0
    %315 = vmatprep.subr.bf16.mxu0 0
    %316 = vmatpush1.bf16.msra.mxu0 0
    %317 = vmatprep.subr.bf16.mxu0 0
    %318 = vmatpush1.bf16.msra.mxu0 0
    %319 = vmatprep.subr.bf16.mxu0 0
    %320 = vmatpush1.bf16.msra.mxu0 0
    %321 = vmatprep.subr.bf16.mxu0 0
    %322 = vmatpush1.bf16.msra.mxu0 0
    %323 = vmatprep.subr.bf16.mxu0 0
    %324 = vmatpush1.bf16.msra.mxu0 0
    %325 = vmatprep.subr.bf16.mxu0 0
    %326 = vmatpush1.bf16.msra.mxu0 0
    %327 = vmatprep.mubr.bf16.mxu0 0
    %328 = vmatmul.mubr.bf16.gmra.mrb[0].mxu0 %v90
    %v329 = vpop.f32.mrb[0].mxu0
    %v330 = vadd.f32 0.0, %v329
    %v331 = vpop.f32.mrb[0].mxu0
    %v332 = vpop.f32.mrb[0].mxu0
    %v333 = vadd.f32 0.0, %v332
    %v334 = vpop.f32.mrb[0].mxu0
    %335 = vdwg.mxu0
    %v368 = vunpack.c.l.b16 %v45
    %v369 = vunpack.c.h.b16 %v45
    %v370 = vunpack.c.l.b16 %v46
    %v371 = vunpack.c.l.b16 %v47
    %v372 = vunpack.c.h.b16 %v47
    %v373 = vunpack.c.l.b16 %v48
    %v374 = vunpack.c.l.b16 %v49
    %v375 = vunpack.c.h.b16 %v49
    %v376 = vunpack.c.l.b16 %v50
    %v377 = vunpack.c.l.b16 %v51
    %v378 = vunpack.c.h.b16 %v51
    %v379 = vunpack.c.l.b16 %v52
    %v380 = vunpack.c.l.b16 %v53
    %v381 = vunpack.c.h.b16 %v53
    %v382 = vunpack.c.l.b16 %v54
    %v383 = vunpack.c.l.b16 %v55
    %v384 = vunpack.c.h.b16 %v55
    %v385 = vunpack.c.l.b16 %v56
    %v386 = vunpack.c.l.b16 %v57
    %v387 = vunpack.c.h.b16 %v57
    %v388 = vunpack.c.l.b16 %v58
    %v389 = vunpack.c.l.b16 %v59
    %v390 = vunpack.c.h.b16 %v59
    %v391 = vunpack.c.l.b16 %v60
    %v392 = vunpack.c.l.b16 %v61
    %v393 = vunpack.c.h.b16 %v61
    %v394 = vunpack.c.l.b16 %v62
    %v395 = vunpack.c.l.b16 %v63
    %v396 = vunpack.c.h.b16 %v63
    %v397 = vunpack.c.l.b16 %v64
    %v398 = vunpack.c.l.b16 %v65
    %v399 = vunpack.c.h.b16 %v65
    %v400 = vunpack.c.l.b16 %v66
    %v401 = vunpack.c.l.b16 %v67
    %v402 = vunpack.c.h.b16 %v67
    %v403 = vunpack.c.l.b16 %v68
    %v404 = vunpack.c.l.b16 %v69
    %v405 = vunpack.c.h.b16 %v69
    %v406 = vunpack.c.l.b16 %v70
    %v407 = vunpack.c.l.b16 %v71
    %v408 = vunpack.c.h.b16 %v71
    %v409 = vunpack.c.l.b16 %v72
    %v410 = vunpack.c.l.b16 %v73
    %v411 = vunpack.c.h.b16 %v73
    %v412 = vunpack.c.l.b16 %v74
    %v413 = vunpack.c.l.b16 %v75
    %v414 = vunpack.c.h.b16 %v75
    %v415 = vunpack.c.l.b16 %v76
    %v416 = vpack.c.b16 %v371, %v368
    %v417 = vpack.c.b16 %v372, %v369
    %v418 = vpack.c.b16 %v373, %v370
    %v419 = vpack.c.b16 %v377, %v374
    %v420 = vpack.c.b16 %v378, %v375
    %v421 = vpack.c.b16 %v379, %v376
    %v422 = vpack.c.b16 %v383, %v380
    %v423 = vpack.c.b16 %v384, %v381
    %v424 = vpack.c.b16 %v385, %v382
    %v425 = vpack.c.b16 %v389, %v386
    %v426 = vpack.c.b16 %v390, %v387
    %v427 = vpack.c.b16 %v391, %v388
    %v428 = vpack.c.b16 %v395, %v392
    %v429 = vpack.c.b16 %v396, %v393
    %v430 = vpack.c.b16 %v397, %v394
    %v431 = vpack.c.b16 %v401, %v398
    %v432 = vpack.c.b16 %v402, %v399
    %v433 = vpack.c.b16 %v403, %v400
    %v434 = vpack.c.b16 %v407, %v404
    %v435 = vpack.c.b16 %v408, %v405
    %v436 = vpack.c.b16 %v409, %v406
    %v437 = vpack.c.b16 %v413, %v410
    %v438 = vpack.c.b16 %v414, %v411
    %v439 = vpack.c.b16 %v415, %v412
    %464 = vmatprep.subr.bf16.mxu0 %v417
    %465 = vmatpush1.bf16.msra.mxu0 %v416
    %466 = vmatprep.subr.bf16.mxu0 %v420
    %467 = vmatpush1.bf16.msra.mxu0 %v419
    %468 = vmatprep.subr.bf16.mxu0 %v423
    %469 = vmatpush1.bf16.msra.mxu0 %v422
    %470 = vmatprep.subr.bf16.mxu0 %v426
    %471 = vmatpush1.bf16.msra.mxu0 %v425
    %472 = vmatprep.subr.bf16.mxu0 %v429
    %473 = vmatpush1.bf16.msra.mxu0 %v428
    %474 = vmatprep.subr.bf16.mxu0 %v432
    %475 = vmatpush1.bf16.msra.mxu0 %v431
    %476 = vmatprep.subr.bf16.mxu0 %v435
    %477 = vmatpush1.bf16.msra.mxu0 %v434
    %478 = vmatprep.subr.bf16.mxu0 %v438
    %479 = vmatpush1.bf16.msra.mxu0 %v437
    %480 = vmatprep.subr.bf16.mxu0 0
    %481 = vmatpush1.bf16.msra.mxu0 0
    %482 = vmatprep.subr.bf16.mxu0 0
    %483 = vmatpush1.bf16.msra.mxu0 0
    %484 = vmatprep.subr.bf16.mxu0 0
    %485 = vmatpush1.bf16.msra.mxu0 0
    %486 = vmatprep.subr.bf16.mxu0 0
    %487 = vmatpush1.bf16.msra.mxu0 0
    %488 = vmatprep.subr.bf16.mxu0 0
    %489 = vmatpush1.bf16.msra.mxu0 0
    %490 = vmatprep.subr.bf16.mxu0 0
    %491 = vmatpush1.bf16.msra.mxu0 0
    %492 = vmatprep.subr.bf16.mxu0 0
    %493 = vmatpush1.bf16.msra.mxu0 0
    %494 = vmatprep.subr.bf16.mxu0 0
    %495 = vmatpush1.bf16.msra.mxu0 0
    %496 = vmatprep.mubr.bf16.mxu0 0
    %497 = vmatmul.mubr.bf16.gmra.mrb[0].mxu0 %v44
    %v498 = vpop.f32.mrb[0].mxu0
    %v499 = vadd.f32 %v287, %v498
    %v500 = vpop.f32.mrb[0].mxu0
    %v501 = vadd.f32 %v289, %v500
    %v502 = vpop.f32.mrb[0].mxu0
    %v503 = vadd.f32 %v291, %v502
    %v504 = vpop.f32.mrb[0].mxu0
    %v505 = vadd.f32 %v293, %v504
    %506 = vdwg.mxu0
    %507 = vmatprep.subr.bf16.mxu0 0
    %508 = vmatpush1.bf16.msra.mxu0 %v418
    %509 = vmatprep.subr.bf16.mxu0 0
    %510 = vmatpush1.bf16.msra.mxu0 %v421
    %511 = vmatprep.subr.bf16.mxu0 0
    %512 = vmatpush1.bf16.msra.mxu0 %v424
    %513 = vmatprep.subr.bf16.mxu0 0
    %514 = vmatpush1.bf16.msra.mxu0 %v427
    %515 = vmatprep.subr.bf16.mxu0 0
    %516 = vmatpush1.bf16.msra.mxu0 %v430
    %517 = vmatprep.subr.bf16.mxu0 0
    %518 = vmatpush1.bf16.msra.mxu0 %v433
    %519 = vmatprep.subr.bf16.mxu0 0
    %520 = vmatpush1.bf16.msra.mxu0 %v436
    %521 = vmatprep.subr.bf16.mxu0 0
    %522 = vmatpush1.bf16.msra.mxu0 %v439
    %523 = vmatprep.subr.bf16.mxu0 0
    %524 = vmatpush1.bf16.msra.mxu0 0
    %525 = vmatprep.subr.bf16.mxu0 0
    %526 = vmatpush1.bf16.msra.mxu0 0
    %527 = vmatprep.subr.bf16.mxu0 0
    %528 = vmatpush1.bf16.msra.mxu0 0
    %529 = vmatprep.subr.bf16.mxu0 0
    %530 = vmatpush1.bf16.msra.mxu0 0
    %531 = vmatprep.subr.bf16.mxu0 0
    %532 = vmatpush1.bf16.msra.mxu0 0
    %533 = vmatprep.subr.bf16.mxu0 0
    %534 = vmatpush1.bf16.msra.mxu0 0
    %535 = vmatprep.subr.bf16.mxu0 0
    %536 = vmatpush1.bf16.msra.mxu0 0
    %537 = vmatprep.subr.bf16.mxu0 0
    %538 = vmatpush1.bf16.msra.mxu0 0
    %539 = vmatprep.mubr.bf16.mxu0 0
    %540 = vmatmul.mubr.bf16.gmra.mrb[0].mxu0 %v44
    %v541 = vpop.f32.mrb[0].mxu0
    %v542 = vadd.f32 %v330, %v541
    %v543 = vpop.f32.mrb[0].mxu0
    %v544 = vpop.f32.mrb[0].mxu0
    %v545 = vadd.f32 %v333, %v544
    %v546 = vpop.f32.mrb[0].mxu0
    %547 = vdwg.mxu0
    %vm548 = vcmask 1045504
    %v549 = vrot.slane %v40, 2
    %v550 = vrot.slane %v41, 2
    %v551 = vsel %vm548, %v549, %v550
    %v552 = vrot.slane %v42, 2
    %v553 = vrot.slane %v43, 2
    %v554 = vsel %vm548, %v552, %v553
    %v557 = vpack.c.bf16 %v554, %v551
    %s558 = scalar_lea.vmem [#allocation2], 384
    %v559 = vld [vmem:[%s558] sm:$0xff]
    %v560 = vld [vmem:[%s558 + $0x8] sm:$0xf]
    %v561 = vld [vmem:[%s558 + $0xc] sm:$0xff]
    %v562 = vld [vmem:[%s558 + $0x14] sm:$0xf]
    %v563 = vld [vmem:[%s558 + $0x18] sm:$0xff]
    %v564 = vld [vmem:[%s558 + $0x20] sm:$0xf]
    %v565 = vld [vmem:[%s558 + $0x24] sm:$0xff]
    %v566 = vld [vmem:[%s558 + $0x2c] sm:$0xf]
    %v567 = vld [vmem:[%s558 + $0x30] sm:$0xff]
    %v568 = vld [vmem:[%s558 + $0x38] sm:$0xf]
    %v569 = vld [vmem:[%s558 + $0x3c] sm:$0xff]
    %v570 = vld [vmem:[%s558 + $0x44] sm:$0xf]
    %v571 = vld [vmem:[%s558 + $0x48] sm:$0xff]
    %v572 = vld [vmem:[%s558 + $0x50] sm:$0xf]
    %v573 = vld [vmem:[%s558 + $0x54] sm:$0xff]
    %v574 = vld [vmem:[%s558 + $0x5c] sm:$0xf]
    %v575 = vld [vmem:[%s558 + $0x60] sm:$0xff]
    %v576 = vld [vmem:[%s558 + $0x68] sm:$0xf]
    %v577 = vld [vmem:[%s558 + $0x6c] sm:$0xff]
    %v578 = vld [vmem:[%s558 + $0x74] sm:$0xf]
    %v579 = vld [vmem:[%s558 + $0x78] sm:$0xff]
    %v580 = vld [vmem:[%s558 + $0x80] sm:$0xf]
    %v581 = vld [vmem:[%s558 + $0x84] sm:$0xff]
    %v582 = vld [vmem:[%s558 + $0x8c] sm:$0xf]
    %v583 = vld [vmem:[%s558 + $0x90] sm:$0xff]
    %v584 = vld [vmem:[%s558 + $0x98] sm:$0xf]
    %v585 = vld [vmem:[%s558 + $0x9c] sm:$0xff]
    %v586 = vld [vmem:[%s558 + $0xa4] sm:$0xf]
    %v587 = vld [vmem:[%s558 + $0xa8] sm:$0xff]
    %v588 = vld [vmem:[%s558 + $0xb0] sm:$0xf]
    %v589 = vld [vmem:[%s558 + $0xb4] sm:$0xff]
    %v590 = vld [vmem:[%s558 + $0xbc] sm:$0xf]
    %v623 = vunpack.c.l.b16 %v559
    %v624 = vunpack.c.h.b16 %v559
    %v625 = vunpack.c.l.b16 %v560
    %v626 = vunpack.c.l.b16 %v561
    %v627 = vunpack.c.h.b16 %v561
    %v628 = vunpack.c.l.b16 %v562
    %v629 = vunpack.c.l.b16 %v563
    %v630 = vunpack.c.h.b16 %v563
    %v631 = vunpack.c.l.b16 %v564
    %v632 = vunpack.c.l.b16 %v565
    %v633 = vunpack.c.h.b16 %v565
    %v634 = vunpack.c.l.b16 %v566
    %v635 = vunpack.c.l.b16 %v567
    %v636 = vunpack.c.h.b16 %v567
    %v637 = vunpack.c.l.b16 %v568
    %v638 = vunpack.c.l.b16 %v569
    %v639 = vunpack.c.h.b16 %v569
    %v640 = vunpack.c.l.b16 %v570
    %v641 = vunpack.c.l.b16 %v571
    %v642 = vunpack.c.h.b16 %v571
    %v643 = vunpack.c.l.b16 %v572
    %v644 = vunpack.c.l.b16 %v573
    %v645 = vunpack.c.h.b16 %v573
    %v646 = vunpack.c.l.b16 %v574
    %v647 = vunpack.c.l.b16 %v575
    %v648 = vunpack.c.h.b16 %v575
    %v649 = vunpack.c.l.b16 %v576
    %v650 = vunpack.c.l.b16 %v577
    %v651 = vunpack.c.h.b16 %v577
    %v652 = vunpack.c.l.b16 %v578
    %v653 = vunpack.c.l.b16 %v579
    %v654 = vunpack.c.h.b16 %v579
    %v655 = vunpack.c.l.b16 %v580
    %v656 = vunpack.c.l.b16 %v581
    %v657 = vunpack.c.h.b16 %v581
    %v658 = vunpack.c.l.b16 %v582
    %v659 = vunpack.c.l.b16 %v583
    %v660 = vunpack.c.h.b16 %v583
    %v661 = vunpack.c.l.b16 %v584
    %v662 = vunpack.c.l.b16 %v585
    %v663 = vunpack.c.h.b16 %v585
    %v664 = vunpack.c.l.b16 %v586
    %v665 = vunpack.c.l.b16 %v587
    %v666 = vunpack.c.h.b16 %v587
    %v667 = vunpack.c.l.b16 %v588
    %v668 = vunpack.c.l.b16 %v589
    %v669 = vunpack.c.h.b16 %v589
    %v670 = vunpack.c.l.b16 %v590
    %v671 = vpack.c.b16 %v626, %v623
    %v672 = vpack.c.b16 %v627, %v624
    %v673 = vpack.c.b16 %v628, %v625
    %v674 = vpack.c.b16 %v632, %v629
    %v675 = vpack.c.b16 %v633, %v630
    %v676 = vpack.c.b16 %v634, %v631
    %v677 = vpack.c.b16 %v638, %v635
    %v678 = vpack.c.b16 %v639, %v636
    %v679 = vpack.c.b16 %v640, %v637
    %v680 = vpack.c.b16 %v644, %v641
    %v681 = vpack.c.b16 %v645, %v642
    %v682 = vpack.c.b16 %v646, %v643
    %v683 = vpack.c.b16 %v650, %v647
    %v684 = vpack.c.b16 %v651, %v648
    %v685 = vpack.c.b16 %v652, %v649
    %v686 = vpack.c.b16 %v656, %v653
    %v687 = vpack.c.b16 %v657, %v654
    %v688 = vpack.c.b16 %v658, %v655
    %v689 = vpack.c.b16 %v662, %v659
    %v690 = vpack.c.b16 %v663, %v660
    %v691 = vpack.c.b16 %v664, %v661
    %v692 = vpack.c.b16 %v668, %v665
    %v693 = vpack.c.b16 %v669, %v666
    %v694 = vpack.c.b16 %v670, %v667
    %719 = vmatprep.subr.bf16.mxu0 %v672
    %720 = vmatpush1.bf16.msra.mxu0 %v671
    %721 = vmatprep.subr.bf16.mxu0 %v675
    %722 = vmatpush1.bf16.msra.mxu0 %v674
    %723 = vmatprep.subr.bf16.mxu0 %v678
    %724 = vmatpush1.bf16.msra.mxu0 %v677
    %725 = vmatprep.subr.bf16.mxu0 %v681
    %726 = vmatpush1.bf16.msra.mxu0 %v680
    %727 = vmatprep.subr.bf16.mxu0 %v684
    %728 = vmatpush1.bf16.msra.mxu0 %v683
    %729 = vmatprep.subr.bf16.mxu0 %v687
    %730 = vmatpush1.bf16.msra.mxu0 %v686
    %731 = vmatprep.subr.bf16.mxu0 %v690
    %732 = vmatpush1.bf16.msra.mxu0 %v689
    %733 = vmatprep.subr.bf16.mxu0 %v693
    %734 = vmatpush1.bf16.msra.mxu0 %v692
    %735 = vmatprep.subr.bf16.mxu0 0
    %736 = vmatpush1.bf16.msra.mxu0 0
    %737 = vmatprep.subr.bf16.mxu0 0
    %738 = vmatpush1.bf16.msra.mxu0 0
    %739 = vmatprep.subr.bf16.mxu0 0
    %740 = vmatpush1.bf16.msra.mxu0 0
    %741 = vmatprep.subr.bf16.mxu0 0
    %742 = vmatpush1.bf16.msra.mxu0 0
    %743 = vmatprep.subr.bf16.mxu0 0
    %744 = vmatpush1.bf16.msra.mxu0 0
    %745 = vmatprep.subr.bf16.mxu0 0
    %746 = vmatpush1.bf16.msra.mxu0 0
    %747 = vmatprep.subr.bf16.mxu0 0
    %748 = vmatpush1.bf16.msra.mxu0 0
    %749 = vmatprep.subr.bf16.mxu0 0
    %750 = vmatpush1.bf16.msra.mxu0 0
    %751 = vmatprep.mubr.bf16.mxu0 0
    %752 = vmatmul.mubr.bf16.gmra.mrb[0].mxu0 %v557
    %v753 = vpop.f32.mrb[0].mxu0
    %v754 = vadd.f32 0.0, %v753
    %v755 = vpop.f32.mrb[0].mxu0
    %v756 = vadd.f32 0.0, %v755
    %v757 = vpop.f32.mrb[0].mxu0
    %v758 = vadd.f32 0.0, %v757
    %v759 = vpop.f32.mrb[0].mxu0
    %v760 = vadd.f32 0.0, %v759
    %761 = vdwg.mxu0
    %762 = vmatprep.subr.bf16.mxu0 0
    %763 = vmatpush1.bf16.msra.mxu0 %v673
    %764 = vmatprep.subr.bf16.mxu0 0
    %765 = vmatpush1.bf16.msra.mxu0 %v676
    %766 = vmatprep.subr.bf16.mxu0 0
    %767 = vmatpush1.bf16.msra.mxu0 %v679
    %768 = vmatprep.subr.bf16.mxu0 0
    %769 = vmatpush1.bf16.msra.mxu0 %v682
    %770 = vmatprep.subr.bf16.mxu0 0
    %771 = vmatpush1.bf16.msra.mxu0 %v685
    %772 = vmatprep.subr.bf16.mxu0 0
    %773 = vmatpush1.bf16.msra.mxu0 %v688
    %774 = vmatprep.subr.bf16.mxu0 0
    %775 = vmatpush1.bf16.msra.mxu0 %v691
    %776 = vmatprep.subr.bf16.mxu0 0
    %777 = vmatpush1.bf16.msra.mxu0 %v694
    %778 = vmatprep.subr.bf16.mxu0 0
    %779 = vmatpush1.bf16.msra.mxu0 0
    %780 = vmatprep.subr.bf16.mxu0 0
    %781 = vmatpush1.bf16.msra.mxu0 0
    %782 = vmatprep.subr.bf16.mxu0 0
    %783 = vmatpush1.bf16.msra.mxu0 0
    %784 = vmatprep.subr.bf16.mxu0 0
    %785 = vmatpush1.bf16.msra.mxu0 0
    %786 = vmatprep.subr.bf16.mxu0 0
    %787 = vmatpush1.bf16.msra.mxu0 0
    %788 = vmatprep.subr.bf16.mxu0 0
    %789 = vmatpush1.bf16.msra.mxu0 0
    %790 = vmatprep.subr.bf16.mxu0 0
    %791 = vmatpush1.bf16.msra.mxu0 0
    %792 = vmatprep.subr.bf16.mxu0 0
    %793 = vmatpush1.bf16.msra.mxu0 0
    %794 = vmatprep.mubr.bf16.mxu0 0
    %795 = vmatmul.mubr.bf16.gmra.mrb[0].mxu0 %v557
    %v796 = vpop.f32.mrb[0].mxu0
    %v797 = vadd.f32 0.0, %v796
    %v798 = vpop.f32.mrb[0].mxu0
    %v799 = vpop.f32.mrb[0].mxu0
    %v800 = vadd.f32 0.0, %v799
    %v801 = vpop.f32.mrb[0].mxu0
    %802 = vdwg.mxu0
    %v803 = vadd.f32 %v499, %v754
    %v804 = vadd.f32 %v501, %v756
    %v805 = vadd.f32 %v542, %v797
    %v806 = vadd.f32 %v503, %v758
    %v807 = vadd.f32 %v505, %v760
    %v808 = vadd.f32 %v545, %v800
    %vm809 = vcmask 1044480
    %v810 = vrot.slane %v40, 3
    %v811 = vrot.slane %v41, 3
    %v812 = vsel %vm809, %v810, %v811
    %v813 = vrot.slane %v42, 3
    %v814 = vrot.slane %v43, 3
    %v815 = vsel %vm809, %v813, %v814
    %v818 = vpack.c.bf16 %v815, %v812
    %s819 = scalar_lea.vmem [#allocation2], 576
    %v820 = vld [vmem:[%s819] sm:$0xff]
    %v821 = vld [vmem:[%s819 + $0x8] sm:$0xf]
    %v822 = vld [vmem:[%s819 + $0xc] sm:$0xff]
    %v823 = vld [vmem:[%s819 + $0x14] sm:$0xf]
    %v824 = vld [vmem:[%s819 + $0x18] sm:$0xff]
    %v825 = vld [vmem:[%s819 + $0x20] sm:$0xf]
    %v826 = vld [vmem:[%s819 + $0x24] sm:$0xff]
    %v827 = vld [vmem:[%s819 + $0x2c] sm:$0xf]
    %v828 = vld [vmem:[%s819 + $0x30] sm:$0xff]
    %v829 = vld [vmem:[%s819 + $0x38] sm:$0xf]
    %v830 = vld [vmem:[%s819 + $0x3c] sm:$0xff]
    %v831 = vld [vmem:[%s819 + $0x44] sm:$0xf]
    %v832 = vld [vmem:[%s819 + $0x48] sm:$0xff]
    %v833 = vld [vmem:[%s819 + $0x50] sm:$0xf]
    %v834 = vld [vmem:[%s819 + $0x54] sm:$0xff]
    %v835 = vld [vmem:[%s819 + $0x5c] sm:$0xf]
    %v836 = vld [vmem:[%s819 + $0x60] sm:$0xff]
    %v837 = vld [vmem:[%s819 + $0x68] sm:$0xf]
    %v838 = vld [vmem:[%s819 + $0x6c] sm:$0xff]
    %v839 = vld [vmem:[%s819 + $0x74] sm:$0xf]
    %v840 = vld [vmem:[%s819 + $0x78] sm:$0xff]
    %v841 = vld [vmem:[%s819 + $0x80] sm:$0xf]
    %v842 = vld [vmem:[%s819 + $0x84] sm:$0xff]
    %v843 = vld [vmem:[%s819 + $0x8c] sm:$0xf]
    %v844 = vld [vmem:[%s819 + $0x90] sm:$0xff]
    %v845 = vld [vmem:[%s819 + $0x98] sm:$0xf]
    %v846 = vld [vmem:[%s819 + $0x9c] sm:$0xff]
    %v847 = vld [vmem:[%s819 + $0xa4] sm:$0xf]
    %v848 = vld [vmem:[%s819 + $0xa8] sm:$0xff]
    %v849 = vld [vmem:[%s819 + $0xb0] sm:$0xf]
    %v850 = vld [vmem:[%s819 + $0xb4] sm:$0xff]
    %v851 = vld [vmem:[%s819 + $0xbc] sm:$0xf]
    %v884 = vunpack.c.l.b16 %v820
    %v885 = vunpack.c.h.b16 %v820
    %v886 = vunpack.c.l.b16 %v821
    %v887 = vunpack.c.l.b16 %v822
    %v888 = vunpack.c.h.b16 %v822
    %v889 = vunpack.c.l.b16 %v823
    %v890 = vunpack.c.l.b16 %v824
    %v891 = vunpack.c.h.b16 %v824
    %v892 = vunpack.c.l.b16 %v825
    %v893 = vunpack.c.l.b16 %v826
    %v894 = vunpack.c.h.b16 %v826
    %v895 = vunpack.c.l.b16 %v827
    %v896 = vunpack.c.l.b16 %v828
    %v897 = vunpack.c.h.b16 %v828
    %v898 = vunpack.c.l.b16 %v829
    %v899 = vunpack.c.l.b16 %v830
    %v900 = vunpack.c.h.b16 %v830
    %v901 = vunpack.c.l.b16 %v831
    %v902 = vunpack.c.l.b16 %v832
    %v903 = vunpack.c.h.b16 %v832
    %v904 = vunpack.c.l.b16 %v833
    %v905 = vunpack.c.l.b16 %v834
    %v906 = vunpack.c.h.b16 %v834
    %v907 = vunpack.c.l.b16 %v835
    %v908 = vunpack.c.l.b16 %v836
    %v909 = vunpack.c.h.b16 %v836
    %v910 = vunpack.c.l.b16 %v837
    %v911 = vunpack.c.l.b16 %v838
    %v912 = vunpack.c.h.b16 %v838
    %v913 = vunpack.c.l.b16 %v839
    %v914 = vunpack.c.l.b16 %v840
    %v915 = vunpack.c.h.b16 %v840
    %v916 = vunpack.c.l.b16 %v841
    %v917 = vunpack.c.l.b16 %v842
    %v918 = vunpack.c.h.b16 %v842
    %v919 = vunpack.c.l.b16 %v843
    %v920 = vunpack.c.l.b16 %v844
    %v921 = vunpack.c.h.b16 %v844
    %v922 = vunpack.c.l.b16 %v845
    %v923 = vunpack.c.l.b16 %v846
    %v924 = vunpack.c.h.b16 %v846
    %v925 = vunpack.c.l.b16 %v847
    %v926 = vunpack.c.l.b16 %v848
    %v927 = vunpack.c.h.b16 %v848
    %v928 = vunpack.c.l.b16 %v849
    %v929 = vunpack.c.l.b16 %v850
    %v930 = vunpack.c.h.b16 %v850
    %v931 = vunpack.c.l.b16 %v851
    %v932 = vpack.c.b16 %v887, %v884
    %v933 = vpack.c.b16 %v888, %v885
    %v934 = vpack.c.b16 %v889, %v886
    %v935 = vpack.c.b16 %v893, %v890
    %v936 = vpack.c.b16 %v894, %v891
    %v937 = vpack.c.b16 %v895, %v892
    %v938 = vpack.c.b16 %v899, %v896
    %v939 = vpack.c.b16 %v900, %v897
    %v940 = vpack.c.b16 %v901, %v898
    %v941 = vpack.c.b16 %v905, %v902
    %v942 = vpack.c.b16 %v906, %v903
    %v943 = vpack.c.b16 %v907, %v904
    %v944 = vpack.c.b16 %v911, %v908
    %v945 = vpack.c.b16 %v912, %v909
    %v946 = vpack.c.b16 %v913, %v910
    %v947 = vpack.c.b16 %v917, %v914
    %v948 = vpack.c.b16 %v918, %v915
    %v949 = vpack.c.b16 %v919, %v916
    %v950 = vpack.c.b16 %v923, %v920
    %v951 = vpack.c.b16 %v924, %v921
    %v952 = vpack.c.b16 %v925, %v922
    %v953 = vpack.c.b16 %v929, %v926
    %v954 = vpack.c.b16 %v930, %v927
    %v955 = vpack.c.b16 %v931, %v928
    %980 = vmatprep.subr.bf16.mxu0 %v933
    %981 = vmatpush1.bf16.msra.mxu0 %v932
    %982 = vmatprep.subr.bf16.mxu0 %v936
    %983 = vmatpush1.bf16.msra.mxu0 %v935
    %984 = vmatprep.subr.bf16.mxu0 %v939
    %985 = vmatpush1.bf16.msra.mxu0 %v938
    %986 = vmatprep.subr.bf16.mxu0 %v942
    %987 = vmatpush1.bf16.msra.mxu0 %v941
    %988 = vmatprep.subr.bf16.mxu0 %v945
    %989 = vmatpush1.bf16.msra.mxu0 %v944
    %990 = vmatprep.subr.bf16.mxu0 %v948
    %991 = vmatpush1.bf16.msra.mxu0 %v947
    %992 = vmatprep.subr.bf16.mxu0 %v951
    %993 = vmatpush1.bf16.msra.mxu0 %v950
    %994 = vmatprep.subr.bf16.mxu0 %v954
    %995 = vmatpush1.bf16.msra.mxu0 %v953
    %996 = vmatprep.subr.bf16.mxu0 0
    %997 = vmatpush1.bf16.msra.mxu0 0
    %998 = vmatprep.subr.bf16.mxu0 0
    %999 = vmatpush1.bf16.msra.mxu0 0
    %1000 = vmatprep.subr.bf16.mxu0 0
    %1001 = vmatpush1.bf16.msra.mxu0 0
    %1002 = vmatprep.subr.bf16.mxu0 0
    %1003 = vmatpush1.bf16.msra.mxu0 0
    %1004 = vmatprep.subr.bf16.mxu0 0
    %1005 = vmatpush1.bf16.msra.mxu0 0
    %1006 = vmatprep.subr.bf16.mxu0 0
    %1007 = vmatpush1.bf16.msra.mxu0 0
    %1008 = vmatprep.subr.bf16.mxu0 0
    %1009 = vmatpush1.bf16.msra.mxu0 0
    %1010 = vmatprep.subr.bf16.mxu0 0
    %1011 = vmatpush1.bf16.msra.mxu0 0
    %1012 = vmatprep.mubr.bf16.mxu0 0
    %1013 = vmatmul.mubr.bf16.gmra.mrb[0].mxu0 %v818
    %v1014 = vpop.f32.mrb[0].mxu0
    %v1015 = vadd.f32 0.0, %v1014
    %v1016 = vpop.f32.mrb[0].mxu0
    %v1017 = vadd.f32 0.0, %v1016
    %v1018 = vpop.f32.mrb[0].mxu0
    %v1019 = vadd.f32 0.0, %v1018
    %v1020 = vpop.f32.mrb[0].mxu0
    %v1021 = vadd.f32 0.0, %v1020
    %1022 = vdwg.mxu0
    %1023 = vmatprep.subr.bf16.mxu0 0
    %1024 = vmatpush1.bf16.msra.mxu0 %v934
    %1025 = vmatprep.subr.bf16.mxu0 0
    %1026 = vmatpush1.bf16.msra.mxu0 %v937
    %1027 = vmatprep.subr.bf16.mxu0 0
    %1028 = vmatpush1.bf16.msra.mxu0 %v940
    %1029 = vmatprep.subr.bf16.mxu0 0
    %1030 = vmatpush1.bf16.msra.mxu0 %v943
    %1031 = vmatprep.subr.bf16.mxu0 0
    %1032 = vmatpush1.bf16.msra.mxu0 %v946
    %1033 = vmatprep.subr.bf16.mxu0 0
    %1034 = vmatpush1.bf16.msra.mxu0 %v949
    %1035 = vmatprep.subr.bf16.mxu0 0
    %1036 = vmatpush1.bf16.msra.mxu0 %v952
    %1037 = vmatprep.subr.bf16.mxu0 0
    %1038 = vmatpush1.bf16.msra.mxu0 %v955
    %1039 = vmatprep.subr.bf16.mxu0 0
    %1040 = vmatpush1.bf16.msra.mxu0 0
    %1041 = vmatprep.subr.bf16.mxu0 0
    %1042 = vmatpush1.bf16.msra.mxu0 0
    %1043 = vmatprep.subr.bf16.mxu0 0
    %1044 = vmatpush1.bf16.msra.mxu0 0
    %1045 = vmatprep.subr.bf16.mxu0 0
    %1046 = vmatpush1.bf16.msra.mxu0 0
    %1047 = vmatprep.subr.bf16.mxu0 0
    %1048 = vmatpush1.bf16.msra.mxu0 0
    %1049 = vmatprep.subr.bf16.mxu0 0
    %1050 = vmatpush1.bf16.msra.mxu0 0
    %1051 = vmatprep.subr.bf16.mxu0 0
    %1052 = vmatpush1.bf16.msra.mxu0 0
    %1053 = vmatprep.subr.bf16.mxu0 0
    %1054 = vmatpush1.bf16.msra.mxu0 0
    %1055 = vmatprep.mubr.bf16.mxu0 0
    %1056 = vmatmul.mubr.bf16.gmra.mrb[0].mxu0 %v818
    %v1057 = vpop.f32.mrb[0].mxu0
    %v1058 = vadd.f32 0.0, %v1057
    %v1059 = vpop.f32.mrb[0].mxu0
    %v1060 = vpop.f32.mrb[0].mxu0
    %v1061 = vadd.f32 0.0, %v1060
    %v1062 = vpop.f32.mrb[0].mxu0
    %1063 = vdwg.mxu0
    %v1064 = vadd.f32 %v803, %v1015
    %v1065 = vadd.f32 %v804, %v1017
    %v1066 = vadd.f32 %v805, %v1058
    %v1067 = vadd.f32 %v806, %v1019
    %v1068 = vadd.f32 %v807, %v1021
    %v1069 = vadd.f32 %v808, %v1061
    %vm1070 = vcmask 1043456
    %v1071 = vrot.slane %v40, 4
    %v1072 = vrot.slane %v41, 4
    %v1073 = vsel %vm1070, %v1071, %v1072
    %v1074 = vrot.slane %v42, 4
    %v1075 = vrot.slane %v43, 4
    %v1076 = vsel %vm1070, %v1074, %v1075
    %v1079 = vpack.c.bf16 %v1076, %v1073
    %s1080 = scalar_lea.vmem [#allocation2], 768
    %v1081 = vld [vmem:[%s1080] sm:$0xff]
    %v1082 = vld [vmem:[%s1080 + $0x8] sm:$0xf]
    %v1083 = vld [vmem:[%s1080 + $0xc] sm:$0xff]
    %v1084 = vld [vmem:[%s1080 + $0x14] sm:$0xf]
    %v1085 = vld [vmem:[%s1080 + $0x18] sm:$0xff]
    %v1086 = vld [vmem:[%s1080 + $0x20] sm:$0xf]
    %v1087 = vld [vmem:[%s1080 + $0x24] sm:$0xff]
    %v1088 = vld [vmem:[%s1080 + $0x2c] sm:$0xf]
    %v1089 = vld [vmem:[%s1080 + $0x30] sm:$0xff]
    %v1090 = vld [vmem:[%s1080 + $0x38] sm:$0xf]
    %v1091 = vld [vmem:[%s1080 + $0x3c] sm:$0xff]
    %v1092 = vld [vmem:[%s1080 + $0x44] sm:$0xf]
    %v1093 = vld [vmem:[%s1080 + $0x48] sm:$0xff]
    %v1094 = vld [vmem:[%s1080 + $0x50] sm:$0xf]
    %v1095 = vld [vmem:[%s1080 + $0x54] sm:$0xff]
    %v1096 = vld [vmem:[%s1080 + $0x5c] sm:$0xf]
    %v1097 = vld [vmem:[%s1080 + $0x60] sm:$0xff]
    %v1098 = vld [vmem:[%s1080 + $0x68] sm:$0xf]
    %v1099 = vld [vmem:[%s1080 + $0x6c] sm:$0xff]
    %v1100 = vld [vmem:[%s1080 + $0x74] sm:$0xf]
    %v1101 = vld [vmem:[%s1080 + $0x78] sm:$0xff]
    %v1102 = vld [vmem:[%s1080 + $0x80] sm:$0xf]
    %v1103 = vld [vmem:[%s1080 + $0x84] sm:$0xff]
    %v1104 = vld [vmem:[%s1080 + $0x8c] sm:$0xf]
    %v1105 = vld [vmem:[%s1080 + $0x90] sm:$0xff]
    %v1106 = vld [vmem:[%s1080 + $0x98] sm:$0xf]
    %v1107 = vld [vmem:[%s1080 + $0x9c] sm:$0xff]
    %v1108 = vld [vmem:[%s1080 + $0xa4] sm:$0xf]
    %v1109 = vld [vmem:[%s1080 + $0xa8] sm:$0xff]
    %v1110 = vld [vmem:[%s1080 + $0xb0] sm:$0xf]
    %v1111 = vld [vmem:[%s1080 + $0xb4] sm:$0xff]
    %v1112 = vld [vmem:[%s1080 + $0xbc] sm:$0xf]
    %v1145 = vunpack.c.l.b16 %v1081
    %v1146 = vunpack.c.h.b16 %v1081
    %v1147 = vunpack.c.l.b16 %v1082
    %v1148 = vunpack.c.l.b16 %v1083
    %v1149 = vunpack.c.h.b16 %v1083
    %v1150 = vunpack.c.l.b16 %v1084
    %v1151 = vunpack.c.l.b16 %v1085
    %v1152 = vunpack.c.h.b16 %v1085
    %v1153 = vunpack.c.l.b16 %v1086
    %v1154 = vunpack.c.l.b16 %v1087
    %v1155 = vunpack.c.h.b16 %v1087
    %v1156 = vunpack.c.l.b16 %v1088
    %v1157 = vunpack.c.l.b16 %v1089
    %v1158 = vunpack.c.h.b16 %v1089
    %v1159 = vunpack.c.l.b16 %v1090
    %v1160 = vunpack.c.l.b16 %v1091
    %v1161 = vunpack.c.h.b16 %v1091
    %v1162 = vunpack.c.l.b16 %v1092
    %v1163 = vunpack.c.l.b16 %v1093
    %v1164 = vunpack.c.h.b16 %v1093
    %v1165 = vunpack.c.l.b16 %v1094
    %v1166 = vunpack.c.l.b16 %v1095
    %v1167 = vunpack.c.h.b16 %v1095
    %v1168 = vunpack.c.l.b16 %v1096
    %v1169 = vunpack.c.l.b16 %v1097
    %v1170 = vunpack.c.h.b16 %v1097
    %v1171 = vunpack.c.l.b16 %v1098
    %v1172 = vunpack.c.l.b16 %v1099
    %v1173 = vunpack.c.h.b16 %v1099
    %v1174 = vunpack.c.l.b16 %v1100
    %v1175 = vunpack.c.l.b16 %v1101
    %v1176 = vunpack.c.h.b16 %v1101
    %v1177 = vunpack.c.l.b16 %v1102
    %v1178 = vunpack.c.l.b16 %v1103
    %v1179 = vunpack.c.h.b16 %v1103
    %v1180 = vunpack.c.l.b16 %v1104
    %v1181 = vunpack.c.l.b16 %v1105
    %v1182 = vunpack.c.h.b16 %v1105
    %v1183 = vunpack.c.l.b16 %v1106
    %v1184 = vunpack.c.l.b16 %v1107
    %v1185 = vunpack.c.h.b16 %v1107
    %v1186 = vunpack.c.l.b16 %v1108
    %v1187 = vunpack.c.l.b16 %v1109
    %v1188 = vunpack.c.h.b16 %v1109
    %v1189 = vunpack.c.l.b16 %v1110
    %v1190 = vunpack.c.l.b16 %v1111
    %v1191 = vunpack.c.h.b16 %v1111
    %v1192 = vunpack.c.l.b16 %v1112
    %v1193 = vpack.c.b16 %v1148, %v1145
    %v1194 = vpack.c.b16 %v1149, %v1146
    %v1195 = vpack.c.b16 %v1150, %v1147
    %v1196 = vpack.c.b16 %v1154, %v1151
    %v1197 = vpack.c.b16 %v1155, %v1152
    %v1198 = vpack.c.b16 %v1156, %v1153
    %v1199 = vpack.c.b16 %v1160, %v1157
    %v1200 = vpack.c.b16 %v1161, %v1158
    %v1201 = vpack.c.b16 %v1162, %v1159
    %v1202 = vpack.c.b16 %v1166, %v1163
    %v1203 = vpack.c.b16 %v1167, %v1164
    %v1204 = vpack.c.b16 %v1168, %v1165
    %v1205 = vpack.c.b16 %v1172, %v1169
    %v1206 = vpack.c.b16 %v1173, %v1170
    %v1207 = vpack.c.b16 %v1174, %v1171
    %v1208 = vpack.c.b16 %v1178, %v1175
    %v1209 = vpack.c.b16 %v1179, %v1176
    %v1210 = vpack.c.b16 %v1180, %v1177
    %v1211 = vpack.c.b16 %v1184, %v1181
    %v1212 = vpack.c.b16 %v1185, %v1182
    %v1213 = vpack.c.b16 %v1186, %v1183
    %v1214 = vpack.c.b16 %v1190, %v1187
    %v1215 = vpack.c.b16 %v1191, %v1188
    %v1216 = vpack.c.b16 %v1192, %v1189
    %1241 = vmatprep.subr.bf16.mxu0 %v1194
    %1242 = vmatpush1.bf16.msra.mxu0 %v1193
    %1243 = vmatprep.subr.bf16.mxu0 %v1197
    %1244 = vmatpush1.bf16.msra.mxu0 %v1196
    %1245 = vmatprep.subr.bf16.mxu0 %v1200
    %1246 = vmatpush1.bf16.msra.mxu0 %v1199
    %1247 = vmatprep.subr.bf16.mxu0 %v1203
    %1248 = vmatpush1.bf16.msra.mxu0 %v1202
    %1249 = vmatprep.subr.bf16.mxu0 %v1206
    %1250 = vmatpush1.bf16.msra.mxu0 %v1205
    %1251 = vmatprep.subr.bf16.mxu0 %v1209
    %1252 = vmatpush1.bf16.msra.mxu0 %v1208
    %1253 = vmatprep.subr.bf16.mxu0 %v1212
    %1254 = vmatpush1.bf16.msra.mxu0 %v1211
    %1255 = vmatprep.subr.bf16.mxu0 %v1215
    %1256 = vmatpush1.bf16.msra.mxu0 %v1214
    %1257 = vmatprep.subr.bf16.mxu0 0
    %1258 = vmatpush1.bf16.msra.mxu0 0
    %1259 = vmatprep.subr.bf16.mxu0 0
    %1260 = vmatpush1.bf16.msra.mxu0 0
    %1261 = vmatprep.subr.bf16.mxu0 0
    %1262 = vmatpush1.bf16.msra.mxu0 0
    %1263 = vmatprep.subr.bf16.mxu0 0
    %1264 = vmatpush1.bf16.msra.mxu0 0
    %1265 = vmatprep.subr.bf16.mxu0 0
    %1266 = vmatpush1.bf16.msra.mxu0 0
    %1267 = vmatprep.subr.bf16.mxu0 0
    %1268 = vmatpush1.bf16.msra.mxu0 0
    %1269 = vmatprep.subr.bf16.mxu0 0
    %1270 = vmatpush1.bf16.msra.mxu0 0
    %1271 = vmatprep.subr.bf16.mxu0 0
    %1272 = vmatpush1.bf16.msra.mxu0 0
    %1273 = vmatprep.mubr.bf16.mxu0 0
    %1274 = vmatmul.mubr.bf16.gmra.mrb[0].mxu0 %v1079
    %v1275 = vpop.f32.mrb[0].mxu0
    %v1276 = vadd.f32 0.0, %v1275
    %v1277 = vpop.f32.mrb[0].mxu0
    %v1278 = vadd.f32 0.0, %v1277
    %v1279 = vpop.f32.mrb[0].mxu0
    %v1280 = vadd.f32 0.0, %v1279
    %v1281 = vpop.f32.mrb[0].mxu0
    %v1282 = vadd.f32 0.0, %v1281
    %1283 = vdwg.mxu0
    %1284 = vmatprep.subr.bf16.mxu0 0
    %1285 = vmatpush1.bf16.msra.mxu0 %v1195
    %1286 = vmatprep.subr.bf16.mxu0 0
    %1287 = vmatpush1.bf16.msra.mxu0 %v1198
    %1288 = vmatprep.subr.bf16.mxu0 0
    %1289 = vmatpush1.bf16.msra.mxu0 %v1201
    %1290 = vmatprep.subr.bf16.mxu0 0
    %1291 = vmatpush1.bf16.msra.mxu0 %v1204
    %1292 = vmatprep.subr.bf16.mxu0 0
    %1293 = vmatpush1.bf16.msra.mxu0 %v1207
    %1294 = vmatprep.subr.bf16.mxu0 0
    %1295 = vmatpush1.bf16.msra.mxu0 %v1210
    %1296 = vmatprep.subr.bf16.mxu0 0
    %1297 = vmatpush1.bf16.msra.mxu0 %v1213
    %1298 = vmatprep.subr.bf16.mxu0 0
    %1299 = vmatpush1.bf16.msra.mxu0 %v1216
    %1300 = vmatprep.subr.bf16.mxu0 0
    %1301 = vmatpush1.bf16.msra.mxu0 0
    %1302 = vmatprep.subr.bf16.mxu0 0
    %1303 = vmatpush1.bf16.msra.mxu0 0
    %1304 = vmatprep.subr.bf16.mxu0 0
    %1305 = vmatpush1.bf16.msra.mxu0 0
    %1306 = vmatprep.subr.bf16.mxu0 0
    %1307 = vmatpush1.bf16.msra.mxu0 0
    %1308 = vmatprep.subr.bf16.mxu0 0
    %1309 = vmatpush1.bf16.msra.mxu0 0
    %1310 = vmatprep.subr.bf16.mxu0 0
    %1311 = vmatpush1.bf16.msra.mxu0 0
    %1312 = vmatprep.subr.bf16.mxu0 0
    %1313 = vmatpush1.bf16.msra.mxu0 0
    %1314 = vmatprep.subr.bf16.mxu0 0
    %1315 = vmatpush1.bf16.msra.mxu0 0
    %1316 = vmatprep.mubr.bf16.mxu0 0
    %1317 = vmatmul.mubr.bf16.gmra.mrb[0].mxu0 %v1079
    %v1318 = vpop.f32.mrb[0].mxu0
    %v1319 = vadd.f32 0.0, %v1318
    %v1320 = vpop.f32.mrb[0].mxu0
    %v1321 = vpop.f32.mrb[0].mxu0
    %v1322 = vadd.f32 0.0, %v1321
    %v1323 = vpop.f32.mrb[0].mxu0
    %1324 = vdwg.mxu0
    %v1325 = vadd.f32 %v1064, %v1276
    %v1326 = vadd.f32 %v1065, %v1278
    %v1327 = vadd.f32 %v1066, %v1319
    %v1328 = vadd.f32 %v1067, %v1280
    %v1329 = vadd.f32 %v1068, %v1282
    %v1330 = vadd.f32 %v1069, %v1322
    %v1331 = vrot.slane %v1325, 4
    %v1332 = vmax.f32 %v1325, %v1331
    %v1333 = vrot.slane %v1332, 2
    %v1334 = vmax.f32 %v1332, %v1333
    %v1335 = vrot.slane %v1334, 1
    %v1336 = vmax.f32 %v1334, %v1335
    %v1337 = vrot.slane %v1326, 4
    %v1338 = vmax.f32 %v1326, %v1337
    %v1339 = vrot.slane %v1338, 2
    %v1340 = vmax.f32 %v1338, %v1339
    %v1341 = vrot.slane %v1340, 1
    %v1342 = vmax.f32 %v1340, %v1341
    %v1343 = vrot.slane %v1327, 4
    %v1344 = vmax.f32 %v1327, %v1343
    %v1345 = vrot.slane %v1344, 2
    %v1346 = vmax.f32 %v1344, %v1345
    %v1347 = vrot.slane %v1346, 1
    %v1348 = vmax.f32 %v1346, %v1347
    %v1349 = vrot.slane %v1328, 4
    %v1350 = vmax.f32 %v1328, %v1349
    %v1351 = vrot.slane %v1350, 2
    %v1352 = vmax.f32 %v1350, %v1351
    %v1353 = vrot.slane %v1352, 1
    %v1354 = vmax.f32 %v1352, %v1353
    %v1355 = vrot.slane %v1329, 4
    %v1356 = vmax.f32 %v1329, %v1355
    %v1357 = vrot.slane %v1356, 2
    %v1358 = vmax.f32 %v1356, %v1357
    %v1359 = vrot.slane %v1358, 1
    %v1360 = vmax.f32 %v1358, %v1359
    %v1361 = vrot.slane %v1330, 4
    %v1362 = vmax.f32 %v1330, %v1361
    %v1363 = vrot.slane %v1362, 2
    %v1364 = vmax.f32 %v1362, %v1363
    %v1365 = vrot.slane %v1364, 1
    %v1366 = vmax.f32 %v1364, %v1365
    %v1367 = vld [vmem:[%s2] sm:$0x7]
    %v1369 = vlaneseq
    %v1370 = vshrl.u32 %v1369, 7
    %v1371 = vsub.s32 0, %v1370
    %v1372 = vrot.slane %v1367, %v1371
    %v1373 = vlaneseq
    %v1374 = vshrl.u32 %v1373, 7
    %v1375 = vsub.s32 1, %v1374
    %v1376 = vrot.slane %v1367, %v1375
    %v1377 = vlaneseq
    %v1378 = vshrl.u32 %v1377, 7
    %v1379 = vsub.s32 2, %v1378
    %v1380 = vrot.slane %v1367, %v1379
    %v1384 = vadd.f32 %v1336, %v1372
    %v1385 = vadd.f32 %v1342, %v1376
    %v1386 = vadd.f32 %v1348, %v1380
    %v1387 = vadd.f32 %v1354, %v1372
    %v1388 = vadd.f32 %v1360, %v1376
    %v1389 = vadd.f32 %v1366, %v1380
    %v1390 = vmax.f32 %v1384, 0.0
    %v1391 = vmax.f32 %v1385, 0.0
    %v1392 = vmax.f32 %v1386, 0.0
    %v1393 = vmax.f32 %v1387, 0.0
    %v1394 = vmax.f32 %v1388, 0.0
    %v1395 = vmax.f32 %v1389, 0.0
    %v1396 = vpack.c.bf16 %v1390, %v1390
    %v1397 = vpack.c.bf16 %v1391, %v1391
    %v1398 = vpack.c.bf16 %v1392, %v1392
    %v1399 = vpack.c.bf16 %v1393, %v1393
    %v1400 = vpack.c.bf16 %v1394, %v1394
    %v1401 = vpack.c.bf16 %v1395, %v1395
    %v1402 = vld [vmem:[%s3] sm:$0xf]
    %v1403 = vld [vmem:[%s3 + $0x4] sm:$0xf]
    %v1404 = vld [vmem:[%s3 + $0x8] sm:$0xf]
    %v1405 = vld [vmem:[%s3 + $0xc] sm:$0xf]
    %v1406 = vld [vmem:[%s3 + $0x10] sm:$0xf]
    %v1407 = vld [vmem:[%s3 + $0x14] sm:$0xf]
    %v1408 = vld [vmem:[%s3 + $0x18] sm:$0xf]
    %v1409 = vld [vmem:[%s3 + $0x1c] sm:$0xf]
    %v1410 = vld [vmem:[%s3 + $0x20] sm:$0xf]
    %v1411 = vld [vmem:[%s3 + $0x24] sm:$0xf]
    %v1412 = vld [vmem:[%s3 + $0x28] sm:$0xf]
    %v1413 = vld [vmem:[%s3 + $0x2c] sm:$0xf]
    %v1414 = vld [vmem:[%s3 + $0x30] sm:$0xf]
    %v1415 = vld [vmem:[%s3 + $0x34] sm:$0xf]
    %v1416 = vld [vmem:[%s3 + $0x38] sm:$0xf]
    %v1417 = vld [vmem:[%s3 + $0x3c] sm:$0xf]
    %v1418 = vld [vmem:[%s3 + $0x40] sm:$0xf]
    %v1419 = vld [vmem:[%s3 + $0x44] sm:$0xf]
    %v1420 = vld [vmem:[%s3 + $0x48] sm:$0xf]
    %v1421 = vld [vmem:[%s3 + $0x4c] sm:$0xf]
    %v1422 = vld [vmem:[%s3 + $0x50] sm:$0xf]
    %v1423 = vld [vmem:[%s3 + $0x54] sm:$0xf]
    %v1424 = vld [vmem:[%s3 + $0x58] sm:$0xf]
    %v1425 = vld [vmem:[%s3 + $0x5c] sm:$0xf]
    %v1426 = vld [vmem:[%s3 + $0x60] sm:$0xf]
    %v1427 = vld [vmem:[%s3 + $0x64] sm:$0xf]
    %v1428 = vld [vmem:[%s3 + $0x68] sm:$0xf]
    %v1429 = vld [vmem:[%s3 + $0x6c] sm:$0xf]
    %v1430 = vld [vmem:[%s3 + $0x70] sm:$0xf]
    %v1431 = vld [vmem:[%s3 + $0x74] sm:$0xf]
    %v1432 = vld [vmem:[%s3 + $0x78] sm:$0xf]
    %v1433 = vld [vmem:[%s3 + $0x7c] sm:$0xf]
    %v1434 = vld [vmem:[%s3 + $0x80] sm:$0xf]
    %v1435 = vld [vmem:[%s3 + $0x84] sm:$0xf]
    %v1436 = vld [vmem:[%s3 + $0x88] sm:$0xf]
    %v1437 = vld [vmem:[%s3 + $0x8c] sm:$0xf]
    %v1438 = vld [vmem:[%s3 + $0x90] sm:$0xf]
    %v1439 = vld [vmem:[%s3 + $0x94] sm:$0xf]
    %v1440 = vld [vmem:[%s3 + $0x98] sm:$0xf]
    %v1441 = vld [vmem:[%s3 + $0x9c] sm:$0xf]
    %v1442 = vld [vmem:[%s3 + $0xa0] sm:$0xf]
    %v1443 = vld [vmem:[%s3 + $0xa4] sm:$0xf]
    %v1444 = vld [vmem:[%s3 + $0xa8] sm:$0xf]
    %v1445 = vld [vmem:[%s3 + $0xac] sm:$0xf]
    %v1446 = vld [vmem:[%s3 + $0xb0] sm:$0xf]
    %v1447 = vld [vmem:[%s3 + $0xb4] sm:$0xf]
    %v1448 = vld [vmem:[%s3 + $0xb8] sm:$0xf]
    %v1449 = vld [vmem:[%s3 + $0xbc] sm:$0xf]
    %v1450 = vld [vmem:[%s4] sm:$0x1]
    %v1452 = vlaneseq
    %v1453 = vshrl.u32 %v1452, 7
    %v1454 = vsub.s32 0, %v1453
    %v1455 = vrot.slane %v1450, %v1454
    %v1463 = vunpack.c.l.b16 %v1396
    %v1464 = vunpack.c.l.b16 %v1397
    %v1465 = vunpack.c.l.b16 %v1398
    %v1466 = vunpack.c.l.b16 %v1399
    %v1467 = vunpack.c.l.b16 %v1400
    %v1468 = vunpack.c.l.b16 %v1401
    %v1469 = vrot.slane %v1466, 7
    %vm1470 = vcmask 1041409
    %v1471 = vsel %vm1470, %v1469, %v1463
    %v1472 = vrot.slane %v1467, 7
    %v1473 = vsel %vm1470, %v1472, %v1464
    %v1474 = vrot.slane %v1468, 7
    %v1475 = vsel %vm1470, %v1474, %v1465
    %v1476 = vpack.c.b16 %v1471, %v1471
    %v1477 = vpack.c.b16 %v1473, %v1473
    %v1478 = vpack.c.b16 %v1475, %v1475
    %v1530 = vunpack.c.l.b16 %v1402
    %v1531 = vunpack.c.l.b16 %v1403
    %v1532 = vunpack.c.l.b16 %v1404
    %v1533 = vunpack.c.l.b16 %v1405
    %v1534 = vunpack.c.l.b16 %v1406
    %v1535 = vunpack.c.l.b16 %v1407
    %v1536 = vunpack.c.l.b16 %v1408
    %v1537 = vunpack.c.l.b16 %v1409
    %v1538 = vunpack.c.l.b16 %v1410
    %v1539 = vunpack.c.l.b16 %v1411
    %v1540 = vunpack.c.l.b16 %v1412
    %v1541 = vunpack.c.l.b16 %v1413
    %v1542 = vunpack.c.l.b16 %v1414
    %v1543 = vunpack.c.l.b16 %v1415
    %v1544 = vunpack.c.l.b16 %v1416
    %v1545 = vunpack.c.l.b16 %v1417
    %v1546 = vunpack.c.l.b16 %v1418
    %v1547 = vunpack.c.l.b16 %v1419
    %v1548 = vunpack.c.l.b16 %v1420
    %v1549 = vunpack.c.l.b16 %v1421
    %v1550 = vunpack.c.l.b16 %v1422
    %v1551 = vunpack.c.l.b16 %v1423
    %v1552 = vunpack.c.l.b16 %v1424
    %v1553 = vunpack.c.l.b16 %v1425
    %v1554 = vunpack.c.l.b16 %v1426
    %v1555 = vunpack.c.l.b16 %v1427
    %v1556 = vunpack.c.l.b16 %v1428
    %v1557 = vunpack.c.l.b16 %v1429
    %v1558 = vunpack.c.l.b16 %v1430
    %v1559 = vunpack.c.l.b16 %v1431
    %v1560 = vunpack.c.l.b16 %v1432
    %v1561 = vunpack.c.l.b16 %v1433
    %v1562 = vunpack.c.l.b16 %v1434
    %v1563 = vunpack.c.l.b16 %v1435
    %v1564 = vunpack.c.l.b16 %v1436
    %v1565 = vunpack.c.l.b16 %v1437
    %v1566 = vunpack.c.l.b16 %v1438
    %v1567 = vunpack.c.l.b16 %v1439
    %v1568 = vunpack.c.l.b16 %v1440
    %v1569 = vunpack.c.l.b16 %v1441
    %v1570 = vunpack.c.l.b16 %v1442
    %v1571 = vunpack.c.l.b16 %v1443
    %v1572 = vunpack.c.l.b16 %v1444
    %v1573 = vunpack.c.l.b16 %v1445
    %v1574 = vunpack.c.l.b16 %v1446
    %v1575 = vunpack.c.l.b16 %v1447
    %v1576 = vunpack.c.l.b16 %v1448
    %v1577 = vunpack.c.l.b16 %v1449
    %v1578 = vpack.c.b16 %v1531, %v1530
    %v1579 = vpack.c.b16 %v1533, %v1532
    %v1580 = vpack.c.b16 %v1535, %v1534
    %v1581 = vpack.c.b16 %v1537, %v1536
    %v1582 = vpack.c.b16 %v1539, %v1538
    %v1583 = vpack.c.b16 %v1541, %v1540
    %v1584 = vpack.c.b16 %v1543, %v1542
    %v1585 = vpack.c.b16 %v1545, %v1544
    %v1586 = vpack.c.b16 %v1547, %v1546
    %v1587 = vpack.c.b16 %v1549, %v1548
    %v1588 = vpack.c.b16 %v1551, %v1550
    %v1589 = vpack.c.b16 %v1553, %v1552
    %v1590 = vpack.c.b16 %v1555, %v1554
    %v1591 = vpack.c.b16 %v1557, %v1556
    %v1592 = vpack.c.b16 %v1559, %v1558
    %v1593 = vpack.c.b16 %v1561, %v1560
    %v1594 = vpack.c.b16 %v1563, %v1562
    %v1595 = vpack.c.b16 %v1565, %v1564
    %v1596 = vpack.c.b16 %v1567, %v1566
    %v1597 = vpack.c.b16 %v1569, %v1568
    %v1598 = vpack.c.b16 %v1571, %v1570
    %v1599 = vpack.c.b16 %v1573, %v1572
    %v1600 = vpack.c.b16 %v1575, %v1574
    %v1601 = vpack.c.b16 %v1577, %v1576
    %1626 = vmatprep.subr.bf16.mxu0 0
    %1627 = vmatpush1.bf16.msra.mxu0 %v1578
    %1628 = vmatprep.subr.bf16.mxu0 0
    %1629 = vmatpush1.bf16.msra.mxu0 %v1579
    %1630 = vmatprep.subr.bf16.mxu0 0
    %1631 = vmatpush1.bf16.msra.mxu0 %v1580
    %1632 = vmatprep.subr.bf16.mxu0 0
    %1633 = vmatpush1.bf16.msra.mxu0 %v1581
    %1634 = vmatprep.subr.bf16.mxu0 0
    %1635 = vmatpush1.bf16.msra.mxu0 %v1582
    %1636 = vmatprep.subr.bf16.mxu0 0
    %1637 = vmatpush1.bf16.msra.mxu0 %v1583
    %1638 = vmatprep.subr.bf16.mxu0 0
    %1639 = vmatpush1.bf16.msra.mxu0 %v1584
    %1640 = vmatprep.subr.bf16.mxu0 0
    %1641 = vmatpush1.bf16.msra.mxu0 %v1585
    %1642 = vmatprep.subr.bf16.mxu0 0
    %1643 = vmatpush1.bf16.msra.mxu0 %v1586
    %1644 = vmatprep.subr.bf16.mxu0 0
    %1645 = vmatpush1.bf16.msra.mxu0 %v1587
    %1646 = vmatprep.subr.bf16.mxu0 0
    %1647 = vmatpush1.bf16.msra.mxu0 %v1588
    %1648 = vmatprep.subr.bf16.mxu0 0
    %1649 = vmatpush1.bf16.msra.mxu0 %v1589
    %1650 = vmatprep.subr.bf16.mxu0 0
    %1651 = vmatpush1.bf16.msra.mxu0 %v1590
    %1652 = vmatprep.subr.bf16.mxu0 0
    %1653 = vmatpush1.bf16.msra.mxu0 %v1591
    %1654 = vmatprep.subr.bf16.mxu0 0
    %1655 = vmatpush1.bf16.msra.mxu0 %v1592
    %1656 = vmatprep.subr.bf16.mxu0 0
    %1657 = vmatpush1.bf16.msra.mxu0 %v1593
    %1658 = vmatprep.mubr.bf16.mxu0 %v1477
    %1659 = vmatmul.mubr.bf16.gmra.mrb[0].mxu0 %v1476
    %v1660 = vpop.f32.mrb[0].mxu0
    %v1661 = vadd.f32 %v1455, %v1660
    %v1662 = vpop.f32.mrb[0].mxu0
    %v1663 = vpop.f32.mrb[0].mxu0
    %v1664 = vpop.f32.mrb[0].mxu0
    %1665 = vdwg.mxu0
    %1666 = vmatprep.subr.bf16.mxu0 0
    %1667 = vmatpush1.bf16.msra.mxu0 %v1594
    %1668 = vmatprep.subr.bf16.mxu0 0
    %1669 = vmatpush1.bf16.msra.mxu0 %v1595
    %1670 = vmatprep.subr.bf16.mxu0 0
    %1671 = vmatpush1.bf16.msra.mxu0 %v1596
    %1672 = vmatprep.subr.bf16.mxu0 0
    %1673 = vmatpush1.bf16.msra.mxu0 %v1597
    %1674 = vmatprep.subr.bf16.mxu0 0
    %1675 = vmatpush1.bf16.msra.mxu0 %v1598
    %1676 = vmatprep.subr.bf16.mxu0 0
    %1677 = vmatpush1.bf16.msra.mxu0 %v1599
    %1678 = vmatprep.subr.bf16.mxu0 0
    %1679 = vmatpush1.bf16.msra.mxu0 %v1600
    %1680 = vmatprep.subr.bf16.mxu0 0
    %1681 = vmatpush1.bf16.msra.mxu0 %v1601
    %1682 = vmatprep.subr.bf16.mxu0 0
    %1683 = vmatpush1.bf16.msra.mxu0 0
    %1684 = vmatprep.subr.bf16.mxu0 0
    %1685 = vmatpush1.bf16.msra.mxu0 0
    %1686 = vmatprep.subr.bf16.mxu0 0
    %1687 = vmatpush1.bf16.msra.mxu0 0
    %1688 = vmatprep.subr.bf16.mxu0 0
    %1689 = vmatpush1.bf16.msra.mxu0 0
    %1690 = vmatprep.subr.bf16.mxu0 0
    %1691 = vmatpush1.bf16.msra.mxu0 0
    %1692 = vmatprep.subr.bf16.mxu0 0
    %1693 = vmatpush1.bf16.msra.mxu0 0
    %1694 = vmatprep.subr.bf16.mxu0 0
    %1695 = vmatpush1.bf16.msra.mxu0 0
    %1696 = vmatprep.subr.bf16.mxu0 0
    %1697 = vmatpush1.bf16.msra.mxu0 0
    %1698 = vmatprep.mubr.bf16.mxu0 0
    %1699 = vmatmul.mubr.bf16.gmra.mrb[0].mxu0 %v1478
    %v1700 = vpop.f32.mrb[0].mxu0
    %v1701 = vadd.f32 %v1661, %v1700
    %v1702 = vpop.f32.mrb[0].mxu0
    %v1703 = vpop.f32.mrb[0].mxu0
    %v1704 = vpop.f32.mrb[0].mxu0
    %1705 = vdwg.mxu0
    %1706 = vst [vmem:[#allocation5] sm:$0x3] %v1701
    // Predicated region
    $region26: #{textcnn_forward.1} parent=1 // pred_check
      _
    $region27: #{textcnn_forward.1} parent=1 // pred_check_branch
      %1708 = sbr.rel (0) target = $region29
    $region28: #{textcnn_forward.1} parent=1 // pred_region
      %s1710 = ssub.s32 32, 32
      %1711 = vsyncadd [#allocation4], %s1710
      %s1713 = sshll.u32 [#allocation5], 4
      %s1714 = int_to_ptr.vmem [resolvable:$true] %s1713
      %1716 = dma.vmem_to_hbm [thread:$0]  %s1714, 32, %s5, [#allocation4]
    $region29: #{textcnn_forward.1} parent=1 // pred_fallthru
      _
    // Predicated region
    $region30: #{textcnn_forward.1} parent=1 // pred_check
      _
    $region31: #{textcnn_forward.1} parent=1 // pred_check_branch
      %1718 = sbr.rel (0) target = $region33
    $region32: #{textcnn_forward.1} parent=1 // pred_region
      %1719 = dma.done [#allocation4], 32
    $region33: #{textcnn_forward.1} parent=1 // pred_fallthru
      _
    %1720 = vsyncpa [#allocation3], 1
    %1721 = vsyncpa [#allocation4], 1

</llo_original>
